<compile_context>
chip_gen: v7x
topology: tpu7x:2x2x1
jax: 0.10.0
libtpu: 0.0.40
codegen_flags: <defaults>
</compile_context>

<pallas_src>
import functools

import numpy as np
import jax
import jax.numpy as jnp
from jax.experimental import pallas as pl
from jax.experimental.pallas import tpu as pltpu

_GROUP_DIM = 128  # the 4 pixel-shuffle groups, padded to one full MXU lane tile


def _swin_expand_kernel(x_ref, w_ref, g_ref, b_ref, o_ref, *,
                        chalf, eps, matmul_dtype):
    """One (batch, L-tile) grid step.

    x_ref: (1, C, TILE_L) input dtype      w_ref: (C, 2C) matmul dtype
    g_ref/b_ref: (1, 2C) f32 (gamma/beta pre-tiled over the 4 groups)
    o_ref: (1, TILE_L, 2C) out dtype
    """
    c2 = 4 * chalf
    x = x_ref[0]                                       # (C, TILE_L)
    w = w_ref[...]                                     # (C, 2C), already cast

    # Transposed-LHS matmul on the MXU: (C,T)^T @ (C,2C) -> (T,2C), f32 acc.
    y = jax.lax.dot_general(
        x.astype(matmul_dtype), w,
        dimension_numbers=(((0,), (0,)), ((), ())),
        preferred_element_type=jnp.float32)            # (T, 2C) f32

    # Group-membership masks for the 4 pixel-shuffle (p1, p2) channel groups,
    # padded along the group axis to 128 so every mask matmul is exactly
    # MXU-tile aligned.  Built from iota: cheap VPU filler, no extra inputs.
    col = jax.lax.broadcasted_iota(jnp.int32, (c2, _GROUP_DIM), 0)   # channel
    grp = jax.lax.broadcasted_iota(jnp.int32, (c2, _GROUP_DIM), 1)   # group
    lo = grp * chalf
    m = jnp.where(jnp.logical_and(col >= lo, col < lo + chalf), 1.0, 0.0)

    col_t = jax.lax.broadcasted_iota(jnp.int32, (_GROUP_DIM, c2), 1)
    grp_t = jax.lax.broadcasted_iota(jnp.int32, (_GROUP_DIM, c2), 0)
    lo_t = grp_t * chalf
    m_t = jnp.where(jnp.logical_and(col_t >= lo_t, col_t < lo_t + chalf),
                    1.0, 0.0)

    # Two-pass LayerNorm per group, computed full-width (no chalf-wide slices):
    #   stats     = (T,2C) @ (2C,G)  on the idle MXU
    #   broadcast = (T,G)  @ (G,2C)  back to full width
    inv_n = jnp.float32(1.0 / chalf)
    mean_g = jnp.dot(y, m, preferred_element_type=jnp.float32) * inv_n   # (T,G)
    mean = jnp.dot(mean_g, m_t, preferred_element_type=jnp.float32)      # (T,2C)
    cen = y - mean
    var_g = jnp.dot(cen * cen, m, preferred_element_type=jnp.float32) * inv_n
    rstd_g = jax.lax.rsqrt(var_g + jnp.float32(eps))                     # (T,G)
    rstd = jnp.dot(rstd_g, m_t, preferred_element_type=jnp.float32)      # (T,2C)

    gam = g_ref[...]                                   # (1, 2C) f32
    bet = b_ref[...]                                   # (1, 2C) f32
    # One unmasked, fully lane-dense store per tile.
    o_ref[0] = (cen * rstd * gam + bet).astype(o_ref.dtype)


def _choose_tile_l(L, B, C, max_tile_l):
    """(8,128)-friendly L-tile: large enough for BW, small enough for VMEM,
    and giving the grid >= ~8 steps (pipelining / v7x dual-TC sharding)."""
    max_tile = min(int(max_tile_l), 256 if C >= 512 else 512)   # v5e VMEM cap
    max_tile = max(128, max_tile - max_tile % 128)
    if L <= max_tile:
        tile = L                                     # full extent: always legal
    else:
        tile = 0
        for t in range(max_tile, 127, -128):         # multiples of 128
            if L % t == 0:
                tile = t
                break
        if tile == 0:
            # No multiple-of-128 divisor (e.g. L = 56*56): last tile is padded.
            # Safe: LayerNorm is strictly row-wise; padded output rows are
            # dropped on writeback and never read.
            tile = max_tile
    while B * pl.cdiv(L, tile) < 8 and tile > 128:
        smaller = max(128, ((tile // 2) // 128) * 128)
        if smaller == tile:
            break
        tile = smaller
    return tile


def swin_expand(x, w_expand, gamma, beta, eps=1e-5, *,
                matmul_dtype=jnp.bfloat16, out_dtype=None, max_tile_l=512):
    """swin_Expand forward (matches the PyTorch module).

    x:        (B, C, H, W) NCHW feature map.
    w_expand: (C, 2C)  -- TRANSPOSE of nn.Linear(dim, 2*dim, bias=False).weight.
    gamma, beta: (C//2,) LayerNorm affine parameters.
    Returns (B, C//2, 2H, 2W) in x.dtype.

    matmul_dtype: MXU input dtype (bf16 default; jnp.float32 for exact parity).
    out_dtype:    dtype of the Pallas intermediate; defaults to bf16 when the
                  matmul runs in bf16 (LN statistics always stay f32).
    """
    B, C, H, W = x.shape
    L = H * W
    if C % 2:
        raise ValueError("C must be even")
    chalf = C // 2
    c2 = 2 * C
    if w_expand.shape != (C, c2):
        raise ValueError(f"w_expand must be (C, 2C)=({C},{c2}), got "
                         f"{w_expand.shape}; pass nn.Linear(dim, 2*dim).weight.T")
    if gamma.shape != (chalf,) or beta.shape != (chalf,):
        raise ValueError(f"gamma/beta must have shape ({chalf},)")

    if out_dtype is None:
        out_dtype = (jnp.bfloat16
                     if np.dtype(matmul_dtype) == np.dtype(jnp.bfloat16)
                     else jnp.float32)

    # NCHW -> (B, C, L): a free reshape, no HBM transpose.
    x_cl = x.reshape(B, C, L)

    # One-time (tiny) weight cast: halves the resident VMEM copy and removes
    # the per-grid-step VPU cast.  Do NOT pre-cast x (extra un-hidden HBM pass).
    w_mm = w_expand.astype(matmul_dtype)

    # gamma/beta pre-tiled over the 4 pixel-shuffle groups -> full-width FMA.
    gamma2 = jnp.tile(gamma.astype(jnp.float32), 4).reshape(1, c2)
    beta2 = jnp.tile(beta.astype(jnp.float32), 4).reshape(1, c2)

    tile_l = _choose_tile_l(L, B, C, max_tile_l)
    num_lt = pl.cdiv(L, tile_l)

    # Scoped-VMEM budget from the working set (double-buffered in/out blocks,
    # resident weight, f32 temporaries), capped at v7x's 64 MiB physical VMEM.
    in_bytes = np.dtype(x.dtype).itemsize
    w_bytes = np.dtype(matmul_dtype).itemsize
    o_bytes = np.dtype(out_dtype).itemsize
    need = (2 * C * tile_l * in_bytes          # input blocks (double-buffered)
            + 2 * tile_l * c2 * o_bytes        # output blocks
            + 2 * C * c2 * w_bytes             # resident expand weight
            + 5 * tile_l * c2 * 4              # f32 y/cen/mean/rstd/result temps
            + (1 << 20))
    vmem_limit = int(min(64 << 20, max(32 << 20, int(1.5 * need))))

    kernel = functools.partial(_swin_expand_kernel, chalf=chalf, eps=float(eps),
                               matmul_dtype=matmul_dtype)

    y = pl.pallas_call(
        kernel,
        out_shape=jax.ShapeDtypeStruct((B, L, c2), out_dtype),
        grid_spec=pltpu.PrefetchScalarGridSpec(
            num_scalar_prefetch=0,
            grid=(B, num_lt),
            in_specs=[
                pl.BlockSpec((1, C, tile_l), lambda b, lt: (b, 0, lt)),
                pl.BlockSpec((C, c2), lambda b, lt: (0, 0)),     # resident weight
                pl.BlockSpec((1, c2), lambda b, lt: (0, 0)),     # gamma (tiled)
                pl.BlockSpec((1, c2), lambda b, lt: (0, 0)),     # beta  (tiled)
            ],
            out_specs=pl.BlockSpec((1, tile_l, c2), lambda b, lt: (b, lt, 0)),
        ),
        compiler_params=pltpu.CompilerParams(
            dimension_semantics=("parallel", "parallel"),
            vmem_limit_bytes=vmem_limit,
        ),
    )(x_cl, w_mm, gamma2, beta2)

    # Pixel-shuffle 'b h w (p1 p2 c) -> b (h p1) (w p2) c' fused with the final
    # NHWC->NCHW permute: one layout pass reading the (bf16) intermediate and
    # writing the f32 NCHW result.
    # TODO(synk): fuse this rearrange into the kernel's output index_map.
    y = y.reshape(B, H, W, 2, 2, chalf)
    y = jnp.transpose(y, (0, 5, 1, 3, 2, 4))           # (B, C/2, H, 2, W, 2)
    return y.reshape(B, chalf, 2 * H, 2 * W).astype(x.dtype)


def swin_expand_reference(x, w_expand, gamma, beta, eps=1e-5):
    """Pure-JAX reference mirroring the PyTorch forward exactly (f32)."""
    B, C, H, W = x.shape
    chalf = C // 2
    xt = jnp.transpose(x.reshape(B, C, H * W), (0, 2, 1))            # (B, L, C)
    y = jnp.einsum("blc,cd->bld", xt, w_expand,
                   precision=jax.lax.Precision.HIGHEST)              # (B, L, 2C)
    y = y.reshape(B, H, W, 2, 2, chalf)
    y = jnp.transpose(y, (0, 1, 3, 2, 4, 5)).reshape(B, 4 * H * W, chalf)
    mean = jnp.mean(y, axis=-1, keepdims=True)
    var = jnp.mean(jnp.square(y - mean), axis=-1, keepdims=True)
    y = (y - mean) / jnp.sqrt(var + eps) * gamma + beta
    return jnp.transpose(y.reshape(B, 2 * H, 2 * W, chalf), (0, 3, 1, 2))


if __name__ == "__main__":
    key = jax.random.PRNGKey(0)
    k_x, k_w, k_g, k_b = jax.random.split(key, 4)

    # Small but tiling-exercising shapes: L = 1024 -> 4 L-tiles of 256 per batch.
    B, C, H, W = 2, 32, 32, 32          # dim = 32, dim_scale = 2
    x = jax.random.normal(k_x, (B, C, H, W), dtype=jnp.float32)

    # nn.Linear(dim, 2*dim, bias=False): weight (2C, C); we pass its transpose.
    w_expand = jax.random.normal(k_w, (C, 2 * C), dtype=jnp.float32) * 0.1
    gamma = 1.0 + 0.1 * jax.random.normal(k_g, (C // 2,), dtype=jnp.float32)
    beta = 0.1 * jax.random.normal(k_b, (C // 2,), dtype=jnp.float32)

    ref = jax.block_until_ready(swin_expand_reference(x, w_expand, gamma, beta))

    # Exact-f32 MXU path (f32 intermediate).
    out_f32 = jax.block_until_ready(
        swin_expand(x, w_expand, gamma, beta, matmul_dtype=jnp.float32))
    assert out_f32.shape == (B, C // 2, 2 * H, 2 * W), out_f32.shape
    err_f32 = float(jnp.max(jnp.abs(out_f32 - ref)))
    assert jnp.allclose(out_f32, ref, atol=3e-2, rtol=3e-2), (
        f"f32 path mismatch, max abs err {err_f32}")

    # Default bf16-input MXU path with bf16 intermediate (f32 LN statistics).
    out_bf16 = jax.block_until_ready(swin_expand(x, w_expand, gamma, beta))
    assert out_bf16.shape == (B, C // 2, 2 * H, 2 * W), out_bf16.shape
    err_bf16 = float(jnp.max(jnp.abs(out_bf16 - ref)))
    assert jnp.allclose(out_bf16, ref, atol=7e-2, rtol=7e-2), (
        f"bf16 path mismatch, max abs err {err_bf16}")

    print("KERNEL_OK")
</pallas_src>

<mosaic_0001>
module attributes {stable_mosaic.version = 11 : i64} {
  func.func @_swin_expand_kernel(%arg0: i32, %arg1: i32, %arg2: memref<1x32x256xf32, #tpu.memory_space<vmem>>, %arg3: memref<32x64xf32, #tpu.memory_space<vmem>>, %arg4: memref<1x64xf32, #tpu.memory_space<vmem>>, %arg5: memref<1x64xf32, #tpu.memory_space<vmem>>, %arg6: memref<1x256x64xf32, #tpu.memory_space<vmem>>) attributes {dimension_semantics = [#tpu.dimension_semantics<parallel>, #tpu.dimension_semantics<parallel>], iteration_bounds = array<i64: 2, 4>, scalar_prefetch = 0 : i64, scratch_operands = 0 : i64, tpu.core_type = #tpu.core_type<tc>, window_params = [{transform_indices = @transform_0, window_bounds = array<i64: 1, 32, 256>}, {pipeline_mode = #tpu.pipeline_mode<synchronous>, transform_indices = @transform_1, window_bounds = array<i64: 32, 64>}, {pipeline_mode = #tpu.pipeline_mode<synchronous>, transform_indices = @transform_2, window_bounds = array<i64: 1, 64>}, {pipeline_mode = #tpu.pipeline_mode<synchronous>, transform_indices = @transform_3, window_bounds = array<i64: 1, 64>}, {transform_indices = @transform_4, window_bounds = array<i64: 1, 256, 64>}]} {
    %c0 = arith.constant 0 : index
    %c0_0 = arith.constant 0 : index
    %c0_1 = arith.constant 0 : index
    %0 = vector.load %arg2[%c0, %c0_0, %c0_1] : memref<1x32x256xf32, #tpu.memory_space<vmem>>, vector<1x32x256xf32>
    %1 = vector.shape_cast %0 : vector<1x32x256xf32> to vector<32x256xf32>
    %c0_2 = arith.constant 0 : index
    %c0_3 = arith.constant 0 : index
    %2 = vector.load %arg3[%c0_2, %c0_3] : memref<32x64xf32, #tpu.memory_space<vmem>>, vector<32x64xf32>
    %cst = arith.constant dense<0.000000e+00> : vector<256x64xf32>
    %3 = tpu.matmul %1, %2, %cst {dimension_numbers = #tpu.dot_dimension_numbers<[0], [0], [1], [1], [0, 1, 1, 1], [], []>} : vector<32x256xf32>, vector<32x64xf32>, vector<256x64xf32> -> vector<256x64xf32>
    %4 = tpu.iota {dimensions = array<i32: 0>} : vector<64x128xi32>
    %5 = tpu.iota {dimensions = array<i32: 1>} : vector<64x128xi32>
    %c16_i32 = arith.constant 16 : i32
    %6 = vector.broadcast %c16_i32 : i32 to vector<64x128xi32>
    %7 = arith.muli %5, %6 : vector<64x128xi32>
    %8 = arith.cmpi sge, %4, %7 : vector<64x128xi32>
    %c16_i32_4 = arith.constant 16 : i32
    %9 = vector.broadcast %c16_i32_4 : i32 to vector<64x128xi32>
    %10 = arith.addi %7, %9 : vector<64x128xi32>
    %11 = arith.cmpi slt, %4, %10 : vector<64x128xi32>
    %12 = arith.andi %8, %11 : vector<64x128xi1>
    %cst_5 = arith.constant 1.000000e+00 : f32
    %cst_6 = arith.constant 0.000000e+00 : f32
    %13 = vector.broadcast %cst_5 : f32 to vector<64x128xf32>
    %14 = vector.broadcast %cst_6 : f32 to vector<64x128xf32>
    %15 = arith.select %12, %13, %14 : vector<64x128xi1>, vector<64x128xf32>
    %16 = tpu.iota {dimensions = array<i32: 1>} : vector<128x64xi32>
    %17 = tpu.iota {dimensions = array<i32: 0>} : vector<128x64xi32>
    %c16_i32_7 = arith.constant 16 : i32
    %18 = vector.broadcast %c16_i32_7 : i32 to vector<128x64xi32>
    %19 = arith.muli %17, %18 : vector<128x64xi32>
    %20 = arith.cmpi sge, %16, %19 : vector<128x64xi32>
    %c16_i32_8 = arith.constant 16 : i32
    %21 = vector.broadcast %c16_i32_8 : i32 to vector<128x64xi32>
    %22 = arith.addi %19, %21 : vector<128x64xi32>
    %23 = arith.cmpi slt, %16, %22 : vector<128x64xi32>
    %24 = arith.andi %20, %23 : vector<128x64xi1>
    %cst_9 = arith.constant 1.000000e+00 : f32
    %cst_10 = arith.constant 0.000000e+00 : f32
    %25 = vector.broadcast %cst_9 : f32 to vector<128x64xf32>
    %26 = vector.broadcast %cst_10 : f32 to vector<128x64xf32>
    %27 = arith.select %24, %25, %26 : vector<128x64xi1>, vector<128x64xf32>
    %cst_11 = arith.constant dense<0.000000e+00> : vector<256x128xf32>
    %28 = tpu.matmul %3, %15, %cst_11 {dimension_numbers = #tpu.dot_dimension_numbers<[1], [0], [0], [1], [0, 0, 1, 1], [], []>} : vector<256x64xf32>, vector<64x128xf32>, vector<256x128xf32> -> vector<256x128xf32>
    %cst_12 = arith.constant 6.250000e-02 : f32
    %29 = vector.broadcast %cst_12 : f32 to vector<256x128xf32>
    %30 = arith.mulf %28, %29 : vector<256x128xf32>
    %cst_13 = arith.constant dense<0.000000e+00> : vector<256x64xf32>
    %31 = tpu.matmul %30, %27, %cst_13 {dimension_numbers = #tpu.dot_dimension_numbers<[1], [0], [0], [1], [0, 0, 1, 1], [], []>} : vector<256x128xf32>, vector<128x64xf32>, vector<256x64xf32> -> vector<256x64xf32>
    %32 = arith.subf %3, %31 : vector<256x64xf32>
    %33 = arith.mulf %32, %32 : vector<256x64xf32>
    %cst_14 = arith.constant dense<0.000000e+00> : vector<256x128xf32>
    %34 = tpu.matmul %33, %15, %cst_14 {dimension_numbers = #tpu.dot_dimension_numbers<[1], [0], [0], [1], [0, 0, 1, 1], [], []>} : vector<256x64xf32>, vector<64x128xf32>, vector<256x128xf32> -> vector<256x128xf32>
    %cst_15 = arith.constant 6.250000e-02 : f32
    %35 = vector.broadcast %cst_15 : f32 to vector<256x128xf32>
    %36 = arith.mulf %34, %35 : vector<256x128xf32>
    %cst_16 = arith.constant 9.99999974E-6 : f32
    %37 = vector.broadcast %cst_16 : f32 to vector<256x128xf32>
    %38 = arith.addf %36, %37 : vector<256x128xf32>
    %39 = math.rsqrt %38 : vector<256x128xf32>
    %cst_17 = arith.constant dense<0.000000e+00> : vector<256x64xf32>
    %40 = tpu.matmul %39, %27, %cst_17 {dimension_numbers = #tpu.dot_dimension_numbers<[1], [0], [0], [1], [0, 0, 1, 1], [], []>} : vector<256x128xf32>, vector<128x64xf32>, vector<256x64xf32> -> vector<256x64xf32>
    %c0_18 = arith.constant 0 : index
    %c0_19 = arith.constant 0 : index
    %41 = vector.load %arg4[%c0_18, %c0_19] : memref<1x64xf32, #tpu.memory_space<vmem>>, vector<1x64xf32>
    %c0_20 = arith.constant 0 : index
    %c0_21 = arith.constant 0 : index
    %42 = vector.load %arg5[%c0_20, %c0_21] : memref<1x64xf32, #tpu.memory_space<vmem>>, vector<1x64xf32>
    %43 = arith.mulf %32, %40 : vector<256x64xf32>
    %44 = vector.broadcast %41 : vector<1x64xf32> to vector<256x64xf32>
    %45 = arith.mulf %43, %44 : vector<256x64xf32>
    %46 = vector.broadcast %42 : vector<1x64xf32> to vector<256x64xf32>
    %47 = arith.addf %45, %46 : vector<256x64xf32>
    %c0_22 = arith.constant 0 : index
    %c0_23 = arith.constant 0 : index
    %c0_24 = arith.constant 0 : index
    %48 = vector.load %arg6[%c0_22, %c0_23, %c0_24] : memref<1x256x64xf32, #tpu.memory_space<vmem>>, vector<1x256x64xf32>
    %49 = vector.shape_cast %48 : vector<1x256x64xf32> to vector<256x64xf32>
    %50 = vector.shape_cast %47 : vector<256x64xf32> to vector<1x256x64xf32>
    tpu.vector_store %arg6[%c0_22, %c0_23, %c0_24], %50 {strides = array<i32>} : memref<1x256x64xf32, #tpu.memory_space<vmem>>, vector<1x256x64xf32>,
    return
  }
  func.func @transform_0(%arg0: i32, %arg1: i32) -> (i32, i32, i32) {
    %c0_i32 = arith.constant 0 : i32
    %c0_i32_0 = arith.constant 0 : i32
    return %arg0, %c0_i32, %arg1 : i32, i32, i32
  }
  func.func @transform_1(%arg0: i32, %arg1: i32) -> (i32, i32) {
    %c0_i32 = arith.constant 0 : i32
    %c0_i32_0 = arith.constant 0 : i32
    %c0_i32_1 = arith.constant 0 : i32
    return %c0_i32, %c0_i32_0 : i32, i32
  }
  func.func @transform_2(%arg0: i32, %arg1: i32) -> (i32, i32) {
    %c0_i32 = arith.constant 0 : i32
    %c0_i32_0 = arith.constant 0 : i32
    %c0_i32_1 = arith.constant 0 : i32
    return %c0_i32, %c0_i32_0 : i32, i32
  }
  func.func @transform_3(%arg0: i32, %arg1: i32) -> (i32, i32) {
    %c0_i32 = arith.constant 0 : i32
    %c0_i32_0 = arith.constant 0 : i32
    %c0_i32_1 = arith.constant 0 : i32
    return %c0_i32, %c0_i32_0 : i32, i32
  }
  func.func @transform_4(%arg0: i32, %arg1: i32) -> (i32, i32, i32) {
    %c0_i32 = arith.constant 0 : i32
    %c0_i32_0 = arith.constant 0 : i32
    return %arg0, %arg1, %c0_i32 : i32, i32, i32
  }
}

</mosaic_0001>

<llo_original>
// kernel: tpu_custom_call.1
$region0: #{tpu_custom_call.1}
  #allocation0 [shape = 'u32[]', space=smem, size = 0x4, offset = 0x4, fixed_abs, tag = 'smem constant byte address 0x4 - core index']
  #allocation1 [shape = 'u32[144,128]{1,0:T(1,128)}', space=vmem, size = 0x12000, scoped, tag = 'internal scratch']
  %s0 = inlined_call_operand.hbm [shape: f32[2,32,1024], index: 0, kind: input, shape index: {}]
  %s1 = inlined_call_operand.hbm [shape: f32[32,64], index: 1, kind: input, shape index: {}]
  %s2 = inlined_call_operand.vmem [shape: f32[1,64], index: 2, kind: input, shape index: {}]
  %s3 = inlined_call_operand.vmem [shape: f32[1,64], index: 3, kind: input, shape index: {}]
  %s4 = inlined_call_operand.vmem [shape: f32[2,1024,64], index: 4, kind: output, shape index: {}]
  %s5 = sld [smem:[#allocation0]]
  $region57: #{tpu_custom_call.1} parent=0
    _
  %s7 = ssub.s32 1, %s5
  %s8 = scalar_select 0, %s7, %s5
  $region1: #{tpu_custom_call.1} parent=0
    #allocation2 [shape = 'u8[65536]{0}', space=vmem, size = 0x10000, scoped, tag = 'input window, operand 0']
    #allocation3 [shape = 's32[2]{0}', space=sflag, size = 0x8, scoped, tag = 'scoped memory for tpu_custom_call.1']
    #allocation4 [shape = 'u8[16384]{0}', space=vmem, size = 0x4000, scoped, tag = 'input window, operand 1, single buffered']
    #allocation5 [shape = 's32[1]{0}', space=sflag, size = 0x4, scoped, tag = 'scoped memory for tpu_custom_call.1']
    %9 = vsyncpa [#allocation3], 0
    %s10 = scalar_lea.sflag [#allocation3], 1
    %11 = vsyncpa %s10, 0
    %12 = vsyncpa [#allocation5], 0
    loop: start=0, step=1, limit=10
    $region2: #{tpu_custom_call.1} parent=1 // loop_pre_header
      _
    $region3: #{tpu_custom_call.1} parent=1 // loop_header
      %s14 = sphi 0, %s18
      %p15 = scmp.ge.s32.totalorder %s14, 10
      %s21 = sphi 0, %s33
      %s22 = sphi 0, %s29
      %s23 = sphi 0, %s21
      %s24 = sphi 0, %s22
      %s25 = sphi 0, %s23
      %s26 = sphi 0, %s24
      %s38 = sphi 0, %s40
      %s41 = sphi 0, %s38
      %s42 = sphi 0, %s41
      %s58 = sphi 0, %s42
      %s62 = sphi 0, %s62
      %s64 = sphi 0, %s62
      %s65 = sphi 0, %s64
      %s79 = sphi 0, %s65
      %s83 = sphi 0, %s83
      %s85 = sphi 0, %s83
      %s86 = sphi 0, %s85
      %s100 = sphi 0, %s86
      %s104 = sphi 0, %s104
      %s106 = sphi 0, %s104
      %s107 = sphi 0, %s106
      %s121 = sphi 0, %s107
      %s129 = sphi 0, %s131
      %s132 = sphi 0, %s129
      %s133 = sphi 0, %s132
      %s149 = sphi 0, %s133
    $region4: #{tpu_custom_call.1} parent=1 // loop_header_branch
      %17 = sbr.rel (%p15) target = $region8
    $region5: #{tpu_custom_call.1} parent=1 // loop_body
      %s19 = ssub.s32 %s14, 1
      %s20 = ssub.s32 %s14, 2
      %s27 = sadd.s32 1, %s22
      %p28 = scmp.ge.s32.totalorder %s27, 4
      %s29 = scalar_select %p28, 0, %s27
      %s30 = sadd.s32 1, %s21
      %s31 = scalar_select %p28, %s30, %s21
      %p32 = scmp.ge.s32.totalorder %s31, 2
      %s33 = scalar_select %p32, 0, %s31
      %s34 = ssub.s32 %s21, %s33
      %s35 = ssub.s32 %s22, %s29
      %s36 = sor.u32 %s34, %s35
      %p37 = scmp.eq.s32.totalorder %s36, 0
      %s39 = sadd.s32 %s38, 1
      %s40 = scalar_select %p37, %s38, %s39
      %p43 = pneg %p37
      %p44 = scmp.eq.s32.totalorder %s14, 7
      %p45 = por %p43, %p44
      %p46 = scmp.ne.s32.totalorder %s38, %s41
      %p47 = scmp.eq.s32.totalorder %s14, 0
      %p48 = por %p46, %p47
      %p49 = scmp.ne.s32.totalorder %s38, %s41
      %p50 = scmp.eq.s32.totalorder %s19, 7
      %p51 = por %p49, %p50
      %p52 = scmp.ne.s32.totalorder %s41, %s42
      %p53 = scmp.eq.s32.totalorder %s19, 0
      %p54 = por %p52, %p53
      %p55 = scmp.ne.s32.totalorder %s41, %s42
      %p56 = scmp.eq.s32.totalorder %s20, 7
      %p57 = por %p55, %p56
      %p59 = scmp.ne.s32.totalorder %s42, %s58
      %p60 = scmp.eq.s32.totalorder %s20, 0
      %p61 = por %p59, %p60
      %s63 = sadd.s32 %s62, 1
      %p66 = scmp.eq.s32.totalorder %s14, 7
      %p67 = scmp.ne.s32.totalorder %s62, %s64
      %p68 = scmp.eq.s32.totalorder %s14, 0
      %p69 = por %p67, %p68
      %p70 = scmp.ne.s32.totalorder %s62, %s64
      %p71 = scmp.eq.s32.totalorder %s19, 7
      %p72 = por %p70, %p71
      %p73 = scmp.ne.s32.totalorder %s64, %s65
      %p74 = scmp.eq.s32.totalorder %s19, 0
      %p75 = por %p73, %p74
      %p76 = scmp.ne.s32.totalorder %s64, %s65
      %p77 = scmp.eq.s32.totalorder %s20, 7
      %p78 = por %p76, %p77
      %p80 = scmp.ne.s32.totalorder %s65, %s79
      %p81 = scmp.eq.s32.totalorder %s20, 0
      %p82 = por %p80, %p81
      %s84 = sadd.s32 %s83, 1
      %p87 = scmp.eq.s32.totalorder %s14, 7
      %p88 = scmp.ne.s32.totalorder %s83, %s85
      %p89 = scmp.eq.s32.totalorder %s14, 0
      %p90 = por %p88, %p89
      %p91 = scmp.ne.s32.totalorder %s83, %s85
      %p92 = scmp.eq.s32.totalorder %s19, 7
      %p93 = por %p91, %p92
      %p94 = scmp.ne.s32.totalorder %s85, %s86
      %p95 = scmp.eq.s32.totalorder %s19, 0
      %p96 = por %p94, %p95
      %p97 = scmp.ne.s32.totalorder %s85, %s86
      %p98 = scmp.eq.s32.totalorder %s20, 7
      %p99 = por %p97, %p98
      %p101 = scmp.ne.s32.totalorder %s86, %s100
      %p102 = scmp.eq.s32.totalorder %s20, 0
      %p103 = por %p101, %p102
      %s105 = sadd.s32 %s104, 1
      %p108 = scmp.eq.s32.totalorder %s14, 7
      %p109 = scmp.ne.s32.totalorder %s104, %s106
      %p110 = scmp.eq.s32.totalorder %s14, 0
      %p111 = por %p109, %p110
      %p112 = scmp.ne.s32.totalorder %s104, %s106
      %p113 = scmp.eq.s32.totalorder %s19, 7
      %p114 = por %p112, %p113
      %p115 = scmp.ne.s32.totalorder %s106, %s107
      %p116 = scmp.eq.s32.totalorder %s19, 0
      %p117 = por %p115, %p116
      %p118 = scmp.ne.s32.totalorder %s106, %s107
      %p119 = scmp.eq.s32.totalorder %s20, 7
      %p120 = por %p118, %p119
      %p122 = scmp.ne.s32.totalorder %s107, %s121
      %p123 = scmp.eq.s32.totalorder %s20, 0
      %p124 = por %p122, %p123
      %s125 = ssub.s32 %s21, %s33
      %s126 = ssub.s32 %s22, %s29
      %s127 = sor.u32 %s125, %s126
      %p128 = scmp.eq.s32.totalorder %s127, 0
      %s130 = sadd.s32 %s129, 1
      %s131 = scalar_select %p128, %s129, %s130
      %p134 = pneg %p128
      %p135 = scmp.eq.s32.totalorder %s14, 7
      %p136 = por %p134, %p135
      %p137 = scmp.ne.s32.totalorder %s129, %s132
      %p138 = scmp.eq.s32.totalorder %s14, 0
      %p139 = por %p137, %p138
      %p140 = scmp.ne.s32.totalorder %s129, %s132
      %p141 = scmp.eq.s32.totalorder %s19, 7
      %p142 = por %p140, %p141
      %p143 = scmp.ne.s32.totalorder %s132, %s133
      %p144 = scmp.eq.s32.totalorder %s19, 0
      %p145 = por %p143, %p144
      %p146 = scmp.ne.s32.totalorder %s132, %s133
      %p147 = scmp.eq.s32.totalorder %s20, 7
      %p148 = por %p146, %p147
      %p150 = scmp.ne.s32.totalorder %s133, %s149
      %p151 = scmp.eq.s32.totalorder %s20, 0
      %p152 = por %p150, %p151
      %p153 = scmp.le.s32.totalorder 1, %s14
      %p154 = scmp.lt.s32.totalorder %s14, 9
      %p155 = pnand %p153, %p154
      %p156 = pneg %p155
      // Predicated region
      $region9: #{tpu_custom_call.1} parent=5 // pred_check
        _
      $region10: #{tpu_custom_call.1} parent=5 // pred_check_branch
        %158 = sbr.rel (%p155) target = $region12
      $region11: #{tpu_custom_call.1} parent=5 // pred_region
        %s159 = ssub.s32 %s14, 1
        // Predicated region
        $region13: #{tpu_custom_call.1} parent=11 // pred_check
          %p160 = pneg %p75
        $region14: #{tpu_custom_call.1} parent=11 // pred_check_branch
          %162 = sbr.rel (%p160) target = $region16
        $region15: #{tpu_custom_call.1} parent=11 // pred_region
          %s164 = ssub.s32 512, 512
          %165 = vsyncadd [#allocation5], %s164
          %s166 = sshll.u32 [#allocation4], 4
          %s167 = int_to_ptr.vmem [resolvable:$true] %s166
          %172 = dma.hbm_to_vmem [thread:$0]  %s1, 512, %s167, [#allocation5], 128, 128, 8
        $region16: #{tpu_custom_call.1} parent=11 // pred_fallthru
          _
        // Predicated region
        $region17: #{tpu_custom_call.1} parent=11 // pred_check
          %p173 = pneg %p96
        $region18: #{tpu_custom_call.1} parent=11 // pred_check_branch
          %175 = sbr.rel (%p173) target = $region20
        $region19: #{tpu_custom_call.1} parent=11 // pred_region
          _
        $region20: #{tpu_custom_call.1} parent=11 // pred_fallthru
          _
        // Predicated region
        $region21: #{tpu_custom_call.1} parent=11 // pred_check
          %p176 = pneg %p117
        $region22: #{tpu_custom_call.1} parent=11 // pred_check_branch
          %178 = sbr.rel (%p176) target = $region24
        $region23: #{tpu_custom_call.1} parent=11 // pred_region
          _
        $region24: #{tpu_custom_call.1} parent=11 // pred_fallthru
          _
      $region12: #{tpu_custom_call.1} parent=5 // pred_fallthru
        _
      %p179 = scmp.lt.s32.totalorder %s14, 8
      // Predicated region
      $region25: #{tpu_custom_call.1} parent=5 // pred_check
        %p180 = pneg %p179
      $region26: #{tpu_custom_call.1} parent=5 // pred_check_branch
        %182 = sbr.rel (%p180) target = $region28
      $region27: #{tpu_custom_call.1} parent=5 // pred_region
        // Predicated region
        $region29: #{tpu_custom_call.1} parent=27 // pred_check
          %p183 = pneg %p48
        $region30: #{tpu_custom_call.1} parent=27 // pred_check_branch
          %185 = sbr.rel (%p183) target = $region32
        $region31: #{tpu_custom_call.1} parent=27 // pred_region
          %s186 = sand.u32 %s38, 1
          %s187 = scalar_lea.sflag [#allocation3], %s186
          %s188 = sand.u32 %s38, 1
          %s189 = smul.addr %s188, 64
          %s190 = scalar_lea.vmem [#allocation2], %s189
          %s191 = smul.u32 2, %s22
          %s193 = ssub.s32 1024, 1024
          %194 = vsyncadd %s187, %s193
          %s195 = smul.addr %s21, 32
          %s196 = sadd.s32 %s191, %s195
          %s197 = smul.addr %s196, 128
          %s198 = scalar_lea.hbm %s0, %s197
          %s199 = sshll.u32 %s190, 4
          %s200 = int_to_ptr.vmem [resolvable:$true] %s199
          %205 = dma.hbm_to_vmem [thread:$0]  %s198, 1024, %s200, %s187, 1024, 256, 16
        $region32: #{tpu_custom_call.1} parent=27 // pred_fallthru
          _
      $region28: #{tpu_custom_call.1} parent=5 // pred_fallthru
        _
      %p206 = scmp.le.s32.totalorder 1, %s14
      %p207 = scmp.lt.s32.totalorder %s14, 9
      %p208 = pnand %p206, %p207
      %p209 = pneg %p208
      // Predicated region
      $region33: #{tpu_custom_call.1} parent=5 // pred_check
        _
      $region34: #{tpu_custom_call.1} parent=5 // pred_check_branch
        %211 = sbr.rel (%p208) target = $region36
      $region35: #{tpu_custom_call.1} parent=5 // pred_region
        %s212 = ssub.s32 %s14, 1
        %s213 = sand.u32 %s41, 1
        %s214 = scalar_lea.sflag [#allocation3], %s213
        %s215 = sand.u32 %s41, 1
        %s216 = smul.addr %s215, 64
        %s217 = scalar_lea.vmem [#allocation2], %s216
        // Predicated region
        $region37: #{tpu_custom_call.1} parent=35 // pred_check
          %p218 = pneg %p54
        $region38: #{tpu_custom_call.1} parent=35 // pred_check_branch
          %220 = sbr.rel (%p218) target = $region40
        $region39: #{tpu_custom_call.1} parent=35 // pred_region
          %221 = dma.done %s214, 1024
        $region40: #{tpu_custom_call.1} parent=35 // pred_fallthru
          _
        // Predicated region
        $region41: #{tpu_custom_call.1} parent=35 // pred_check
          %p222 = pneg %p75
        $region42: #{tpu_custom_call.1} parent=35 // pred_check_branch
          %224 = sbr.rel (%p222) target = $region44
        $region43: #{tpu_custom_call.1} parent=35 // pred_region
          %225 = dma.done [#allocation5], 512
        $region44: #{tpu_custom_call.1} parent=35 // pred_fallthru
          _
        %s226 = sand.u32 %s41, 1
        %s227 = scalar_lea.sflag [#allocation3], %s226
        %s228 = sand.u32 %s41, 1
        %s229 = smul.addr %s228, 64
        %s230 = scalar_lea.vmem [#allocation2], %s229
        %p231 = pneg %p54
        %p232 = pneg %p51
        %p233 = pneg %p75
        %p234 = pneg %p72
        %p235 = pneg %p96
        %p236 = pneg %p93
        %p237 = pneg %p117
        %p238 = pneg %p114
        %p239 = pneg %p145
        %p240 = pneg %p142
        %s241 = smul.u32 32, %s24
        %p242 = scmp.lt.s32.totalorder %s23, 1
        %s243 = scalar_select %p242, %s23, 1
        %p244 = scmp.lt.s32.totalorder %s241, 127
        %s245 = scalar_select %p244, %s241, 127
        %s246 = smul.addr %s243, 128
        %s247 = sadd.s32 %s245, %s246
        %s248 = smul.addr %s247, 8
        %s249 = scalar_lea.vmem %s4, %s248
        %s250 = smul.u32 2, %s24
        %s251 = smul.u32 32, %s24
        %p252 = scmp.lt.s32.totalorder %s23, 1
        %s253 = scalar_select %p252, %s23, 1
        %p254 = scmp.lt.s32.totalorder %s251, 127
        %s255 = scalar_select %p254, %s251, 127
        %s256 = smul.addr %s253, 128
        %s257 = sadd.s32 %s255, %s256
        %s258 = smul.addr %s257, 8
        %s259 = scalar_lea.vmem %s4, %s258
        %s260 = smul.u32 32, %s24
        %v261 = vld [vmem:[%s217] sm:$0xff]
        %v262 = vld [vmem:[%s217 + $0x8] sm:$0xff]
        %v263 = vld [vmem:[%s217 + $0x10] sm:$0xff]
        %v264 = vld [vmem:[%s217 + $0x18] sm:$0xff]
        %v265 = vld [vmem:[%s217 + $0x20] sm:$0xff]
        %v266 = vld [vmem:[%s217 + $0x28] sm:$0xff]
        %v267 = vld [vmem:[%s217 + $0x30] sm:$0xff]
        %v268 = vld [vmem:[%s217 + $0x38] sm:$0xff]
        %v269 = vld [vmem:[#allocation4] sm:$0xff]
        %v270 = vld [vmem:[#allocation4 + $0x8] sm:$0xff]
        %v271 = vld [vmem:[#allocation4 + $0x10] sm:$0xff]
        %v272 = vld [vmem:[#allocation4 + $0x18] sm:$0xff]
        %273 = vxpose.xlu0.b32.start [1/16] %v261, 128
        %274 = vxpose.xlu0.b32.cont [2/16] %v263, 128
        %275 = vxpose.xlu0.b32.cont [3/16] %v265, 128
        %276 = vxpose.xlu0.b32.cont [4/16] %v267, 128
        %277 = vxpose.xlu0.b32.cont [5/16] 0.0, 128
        %278 = vxpose.xlu0.b32.cont [6/16] 0.0, 128
        %279 = vxpose.xlu0.b32.cont [7/16] 0.0, 128
        %280 = vxpose.xlu0.b32.cont [8/16] 0.0, 128
        %281 = vxpose.xlu0.b32.cont [9/16] 0.0, 128
        %282 = vxpose.xlu0.b32.cont [10/16] 0.0, 128
        %283 = vxpose.xlu0.b32.cont [11/16] 0.0, 128
        %284 = vxpose.xlu0.b32.cont [12/16] 0.0, 128
        %285 = vxpose.xlu0.b32.cont [13/16] 0.0, 128
        %286 = vxpose.xlu0.b32.cont [14/16] 0.0, 128
        %287 = vxpose.xlu0.b32.cont [15/16] 0.0, 128
        %288 = vxpose.xlu0.b32.end [16/16] 0.0, 128
        %v289 = vpop.trf.xlu0
        %v290 = vpop.trf.xlu0
        %v291 = vpop.trf.xlu0
        %v292 = vpop.trf.xlu0
        %v293 = vpop.trf.xlu0
        %v294 = vpop.trf.xlu0
        %v295 = vpop.trf.xlu0
        %v296 = vpop.trf.xlu0
        %v297 = vpop.trf.xlu0
        %v298 = vpop.trf.xlu0
        %v299 = vpop.trf.xlu0
        %v300 = vpop.trf.xlu0
        %v301 = vpop.trf.xlu0
        %v302 = vpop.trf.xlu0
        %v303 = vpop.trf.xlu0
        %v304 = vpop.trf.xlu0
        %305 = vxpose.xlu0.b32.start [1/16] %v262, 128
        %306 = vxpose.xlu0.b32.cont [2/16] %v264, 128
        %307 = vxpose.xlu0.b32.cont [3/16] %v266, 128
        %308 = vxpose.xlu0.b32.cont [4/16] %v268, 128
        %309 = vxpose.xlu0.b32.cont [5/16] 0.0, 128
        %310 = vxpose.xlu0.b32.cont [6/16] 0.0, 128
        %311 = vxpose.xlu0.b32.cont [7/16] 0.0, 128
        %312 = vxpose.xlu0.b32.cont [8/16] 0.0, 128
        %313 = vxpose.xlu0.b32.cont [9/16] 0.0, 128
        %314 = vxpose.xlu0.b32.cont [10/16] 0.0, 128
        %315 = vxpose.xlu0.b32.cont [11/16] 0.0, 128
        %316 = vxpose.xlu0.b32.cont [12/16] 0.0, 128
        %317 = vxpose.xlu0.b32.cont [13/16] 0.0, 128
        %318 = vxpose.xlu0.b32.cont [14/16] 0.0, 128
        %319 = vxpose.xlu0.b32.cont [15/16] 0.0, 128
        %320 = vxpose.xlu0.b32.end [16/16] 0.0, 128
        %v321 = vpop.trf.xlu0
        %v322 = vpop.trf.xlu0
        %v323 = vpop.trf.xlu0
        %v324 = vpop.trf.xlu0
        %v325 = vpop.trf.xlu0
        %v326 = vpop.trf.xlu0
        %v327 = vpop.trf.xlu0
        %v328 = vpop.trf.xlu0
        %v329 = vpop.trf.xlu0
        %v330 = vpop.trf.xlu0
        %v331 = vpop.trf.xlu0
        %v332 = vpop.trf.xlu0
        %v333 = vpop.trf.xlu0
        %v334 = vpop.trf.xlu0
        %v335 = vpop.trf.xlu0
        %v336 = vpop.trf.xlu0
        %vm337 = vcmask 261120
        %v339 = vsel %vm337, %v289, 0
        %v342 = vsel %vm337, %v290, 0
        %v345 = vsel %vm337, %v291, 0
        %v348 = vsel %vm337, %v292, 0
        %v351 = vsel %vm337, %v293, 0
        %v354 = vsel %vm337, %v294, 0
        %v357 = vsel %vm337, %v295, 0
        %v360 = vsel %vm337, %v296, 0
        %v363 = vsel %vm337, %v297, 0
        %v366 = vsel %vm337, %v298, 0
        %v369 = vsel %vm337, %v299, 0
        %v372 = vsel %vm337, %v300, 0
        %v375 = vsel %vm337, %v301, 0
        %v378 = vsel %vm337, %v302, 0
        %v381 = vsel %vm337, %v303, 0
        %v384 = vsel %vm337, %v304, 0
        %v387 = vsel %vm337, %v321, 0
        %v390 = vsel %vm337, %v322, 0
        %v393 = vsel %vm337, %v323, 0
        %v396 = vsel %vm337, %v324, 0
        %v399 = vsel %vm337, %v325, 0
        %v402 = vsel %vm337, %v326, 0
        %v405 = vsel %vm337, %v327, 0
        %v408 = vsel %vm337, %v328, 0
        %v411 = vsel %vm337, %v329, 0
        %v414 = vsel %vm337, %v330, 0
        %v417 = vsel %vm337, %v331, 0
        %v420 = vsel %vm337, %v332, 0
        %v423 = vsel %vm337, %v333, 0
        %v426 = vsel %vm337, %v334, 0
        %v429 = vsel %vm337, %v335, 0
        %v432 = vsel %vm337, %v336, 0
        %434 = vmatprep.subr.mxu0 0.0
        %435 = vmatpush1.msra.mxu0 %v269
        %436 = vmatprep.subr.mxu0 0.0
        %437 = vmatpush1.msra.mxu0 %v270
        %438 = vmatprep.subr.mxu0 0.0
        %439 = vmatpush1.msra.mxu0 %v271
        %440 = vmatprep.subr.mxu0 0.0
        %441 = vmatpush1.msra.mxu0 %v272
        %442 = vmatprep.subr.mxu0 0.0
        %443 = vmatpush1.msra.mxu0 0.0
        %444 = vmatprep.subr.mxu0 0.0
        %445 = vmatpush1.msra.mxu0 0.0
        %446 = vmatprep.subr.mxu0 0.0
        %447 = vmatpush1.msra.mxu0 0.0
        %448 = vmatprep.subr.mxu0 0.0
        %449 = vmatpush1.msra.mxu0 0.0
        %450 = vmatprep.subr.mxu0 0.0
        %451 = vmatpush1.msra.mxu0 0.0
        %452 = vmatprep.subr.mxu0 0.0
        %453 = vmatpush1.msra.mxu0 0.0
        %454 = vmatprep.subr.mxu0 0.0
        %455 = vmatpush1.msra.mxu0 0.0
        %456 = vmatprep.subr.mxu0 0.0
        %457 = vmatpush1.msra.mxu0 0.0
        %458 = vmatprep.subr.mxu0 0.0
        %459 = vmatpush1.msra.mxu0 0.0
        %460 = vmatprep.subr.mxu0 0.0
        %461 = vmatpush1.msra.mxu0 0.0
        %462 = vmatprep.subr.mxu0 0.0
        %463 = vmatpush1.msra.mxu0 0.0
        %464 = vmatprep.subr.mxu0 0.0
        %465 = vmatpush1.msra.mxu0 0.0
        %466 = vmatprep.subr.mxu0 0.0
        %467 = vmatpush1.msra.mxu0 0.0
        %468 = vmatprep.subr.mxu0 0.0
        %469 = vmatpush1.msra.mxu0 0.0
        %470 = vmatprep.subr.mxu0 0.0
        %471 = vmatpush1.msra.mxu0 0.0
        %472 = vmatprep.subr.mxu0 0.0
        %473 = vmatpush1.msra.mxu0 0.0
        %474 = vmatprep.subr.mxu0 0.0
        %475 = vmatpush1.msra.mxu0 0.0
        %476 = vmatprep.subr.mxu0 0.0
        %477 = vmatpush1.msra.mxu0 0.0
        %478 = vmatprep.subr.mxu0 0.0
        %479 = vmatpush1.msra.mxu0 0.0
        %480 = vmatprep.subr.mxu0 0.0
        %481 = vmatpush1.msra.mxu0 0.0
        %482 = vmatprep.subr.mxu0 0.0
        %483 = vmatpush1.msra.mxu0 0.0
        %484 = vmatprep.subr.mxu0 0.0
        %485 = vmatpush1.msra.mxu0 0.0
        %486 = vmatprep.subr.mxu0 0.0
        %487 = vmatpush1.msra.mxu0 0.0
        %488 = vmatprep.subr.mxu0 0.0
        %489 = vmatpush1.msra.mxu0 0.0
        %490 = vmatprep.subr.mxu0 0.0
        %491 = vmatpush1.msra.mxu0 0.0
        %492 = vmatprep.subr.mxu0 0.0
        %493 = vmatpush1.msra.mxu0 0.0
        %494 = vmatprep.subr.mxu0 0.0
        %495 = vmatpush1.msra.mxu0 0.0
        %496 = vmatprep.subr.mxu0 0.0
        %497 = vmatpush1.msra.mxu0 0.0
        %498 = vmatprep.mubr.f32.mxu0 0.0
        %499 = vmatmul.mubr.f32.gmra.mrb[0].mxu0 %v339
        %v500 = vpop.f32.mrb[0].mxu0
        %v501 = vadd.f32 0.0, %v500
        %v502 = vpop.f32.mrb[0].mxu0
        %503 = vmatprep.mubr.f32.mxu0 0.0
        %504 = vmatmul.mubr.f32.gmra.mrb[0].mxu0 %v342
        %v505 = vpop.f32.mrb[0].mxu0
        %v506 = vadd.f32 0.0, %v505
        %v507 = vpop.f32.mrb[0].mxu0
        %508 = vmatprep.mubr.f32.mxu0 0.0
        %509 = vmatmul.mubr.f32.gmra.mrb[0].mxu0 %v345
        %v510 = vpop.f32.mrb[0].mxu0
        %v511 = vadd.f32 0.0, %v510
        %v512 = vpop.f32.mrb[0].mxu0
        %513 = vmatprep.mubr.f32.mxu0 0.0
        %514 = vmatmul.mubr.f32.gmra.mrb[0].mxu0 %v348
        %v515 = vpop.f32.mrb[0].mxu0
        %v516 = vadd.f32 0.0, %v515
        %v517 = vpop.f32.mrb[0].mxu0
        %518 = vmatprep.mubr.f32.mxu0 0.0
        %519 = vmatmul.mubr.f32.gmra.mrb[0].mxu0 %v351
        %v520 = vpop.f32.mrb[0].mxu0
        %v521 = vadd.f32 0.0, %v520
        %v522 = vpop.f32.mrb[0].mxu0
        %523 = vmatprep.mubr.f32.mxu0 0.0
        %524 = vmatmul.mubr.f32.gmra.mrb[0].mxu0 %v354
        %v525 = vpop.f32.mrb[0].mxu0
        %v526 = vadd.f32 0.0, %v525
        %v527 = vpop.f32.mrb[0].mxu0
        %528 = vmatprep.mubr.f32.mxu0 0.0
        %529 = vmatmul.mubr.f32.gmra.mrb[0].mxu0 %v357
        %v530 = vpop.f32.mrb[0].mxu0
        %v531 = vadd.f32 0.0, %v530
        %v532 = vpop.f32.mrb[0].mxu0
        %533 = vmatprep.mubr.f32.mxu0 0.0
        %534 = vmatmul.mubr.f32.gmra.mrb[0].mxu0 %v360
        %v535 = vpop.f32.mrb[0].mxu0
        %v536 = vadd.f32 0.0, %v535
        %v537 = vpop.f32.mrb[0].mxu0
        %538 = vmatprep.mubr.f32.mxu0 0.0
        %539 = vmatmul.mubr.f32.gmra.mrb[0].mxu0 %v363
        %v540 = vpop.f32.mrb[0].mxu0
        %v541 = vadd.f32 0.0, %v540
        %v542 = vpop.f32.mrb[0].mxu0
        %543 = vmatprep.mubr.f32.mxu0 0.0
        %544 = vmatmul.mubr.f32.gmra.mrb[0].mxu0 %v366
        %v545 = vpop.f32.mrb[0].mxu0
        %v546 = vadd.f32 0.0, %v545
        %v547 = vpop.f32.mrb[0].mxu0
        %548 = vmatprep.mubr.f32.mxu0 0.0
        %549 = vmatmul.mubr.f32.gmra.mrb[0].mxu0 %v369
        %v550 = vpop.f32.mrb[0].mxu0
        %v551 = vadd.f32 0.0, %v550
        %v552 = vpop.f32.mrb[0].mxu0
        %553 = vmatprep.mubr.f32.mxu0 0.0
        %554 = vmatmul.mubr.f32.gmra.mrb[0].mxu0 %v372
        %v555 = vpop.f32.mrb[0].mxu0
        %v556 = vadd.f32 0.0, %v555
        %v557 = vpop.f32.mrb[0].mxu0
        %558 = vmatprep.mubr.f32.mxu0 0.0
        %559 = vmatmul.mubr.f32.gmra.mrb[0].mxu0 %v375
        %v560 = vpop.f32.mrb[0].mxu0
        %v561 = vadd.f32 0.0, %v560
        %v562 = vpop.f32.mrb[0].mxu0
        %563 = vmatprep.mubr.f32.mxu0 0.0
        %564 = vmatmul.mubr.f32.gmra.mrb[0].mxu0 %v378
        %v565 = vpop.f32.mrb[0].mxu0
        %v566 = vadd.f32 0.0, %v565
        %v567 = vpop.f32.mrb[0].mxu0
        %568 = vmatprep.mubr.f32.mxu0 0.0
        %569 = vmatmul.mubr.f32.gmra.mrb[0].mxu0 %v381
        %v570 = vpop.f32.mrb[0].mxu0
        %v571 = vadd.f32 0.0, %v570
        %v572 = vpop.f32.mrb[0].mxu0
        %573 = vmatprep.mubr.f32.mxu0 0.0
        %574 = vmatmul.mubr.f32.gmra.mrb[0].mxu0 %v384
        %v575 = vpop.f32.mrb[0].mxu0
        %v576 = vadd.f32 0.0, %v575
        %v577 = vpop.f32.mrb[0].mxu0
        %578 = vmatprep.mubr.f32.mxu0 0.0
        %579 = vmatmul.mubr.f32.gmra.mrb[0].mxu0 %v387
        %v580 = vpop.f32.mrb[0].mxu0
        %v581 = vadd.f32 0.0, %v580
        %v582 = vpop.f32.mrb[0].mxu0
        %583 = vmatprep.mubr.f32.mxu0 0.0
        %584 = vmatmul.mubr.f32.gmra.mrb[0].mxu0 %v390
        %v585 = vpop.f32.mrb[0].mxu0
        %v586 = vadd.f32 0.0, %v585
        %v587 = vpop.f32.mrb[0].mxu0
        %588 = vmatprep.mubr.f32.mxu0 0.0
        %589 = vmatmul.mubr.f32.gmra.mrb[0].mxu0 %v393
        %v590 = vpop.f32.mrb[0].mxu0
        %v591 = vadd.f32 0.0, %v590
        %v592 = vpop.f32.mrb[0].mxu0
        %593 = vmatprep.mubr.f32.mxu0 0.0
        %594 = vmatmul.mubr.f32.gmra.mrb[0].mxu0 %v396
        %v595 = vpop.f32.mrb[0].mxu0
        %v596 = vadd.f32 0.0, %v595
        %v597 = vpop.f32.mrb[0].mxu0
        %598 = vmatprep.mubr.f32.mxu0 0.0
        %599 = vmatmul.mubr.f32.gmra.mrb[0].mxu0 %v399
        %v600 = vpop.f32.mrb[0].mxu0
        %v601 = vadd.f32 0.0, %v600
        %v602 = vpop.f32.mrb[0].mxu0
        %603 = vmatprep.mubr.f32.mxu0 0.0
        %604 = vmatmul.mubr.f32.gmra.mrb[0].mxu0 %v402
        %v605 = vpop.f32.mrb[0].mxu0
        %v606 = vadd.f32 0.0, %v605
        %v607 = vpop.f32.mrb[0].mxu0
        %608 = vmatprep.mubr.f32.mxu0 0.0
        %609 = vmatmul.mubr.f32.gmra.mrb[0].mxu0 %v405
        %v610 = vpop.f32.mrb[0].mxu0
        %v611 = vadd.f32 0.0, %v610
        %v612 = vpop.f32.mrb[0].mxu0
        %613 = vmatprep.mubr.f32.mxu0 0.0
        %614 = vmatmul.mubr.f32.gmra.mrb[0].mxu0 %v408
        %v615 = vpop.f32.mrb[0].mxu0
        %v616 = vadd.f32 0.0, %v615
        %v617 = vpop.f32.mrb[0].mxu0
        %618 = vmatprep.mubr.f32.mxu0 0.0
        %619 = vmatmul.mubr.f32.gmra.mrb[0].mxu0 %v411
        %v620 = vpop.f32.mrb[0].mxu0
        %v621 = vadd.f32 0.0, %v620
        %v622 = vpop.f32.mrb[0].mxu0
        %623 = vmatprep.mubr.f32.mxu0 0.0
        %624 = vmatmul.mubr.f32.gmra.mrb[0].mxu0 %v414
        %v625 = vpop.f32.mrb[0].mxu0
        %v626 = vadd.f32 0.0, %v625
        %v627 = vpop.f32.mrb[0].mxu0
        %628 = vmatprep.mubr.f32.mxu0 0.0
        %629 = vmatmul.mubr.f32.gmra.mrb[0].mxu0 %v417
        %v630 = vpop.f32.mrb[0].mxu0
        %v631 = vadd.f32 0.0, %v630
        %v632 = vpop.f32.mrb[0].mxu0
        %633 = vmatprep.mubr.f32.mxu0 0.0
        %634 = vmatmul.mubr.f32.gmra.mrb[0].mxu0 %v420
        %v635 = vpop.f32.mrb[0].mxu0
        %v636 = vadd.f32 0.0, %v635
        %v637 = vpop.f32.mrb[0].mxu0
        %638 = vmatprep.mubr.f32.mxu0 0.0
        %639 = vmatmul.mubr.f32.gmra.mrb[0].mxu0 %v423
        %v640 = vpop.f32.mrb[0].mxu0
        %v641 = vadd.f32 0.0, %v640
        %v642 = vpop.f32.mrb[0].mxu0
        %643 = vmatprep.mubr.f32.mxu0 0.0
        %644 = vmatmul.mubr.f32.gmra.mrb[0].mxu0 %v426
        %v645 = vpop.f32.mrb[0].mxu0
        %v646 = vadd.f32 0.0, %v645
        %v647 = vpop.f32.mrb[0].mxu0
        %648 = vmatprep.mubr.f32.mxu0 0.0
        %649 = vmatmul.mubr.f32.gmra.mrb[0].mxu0 %v429
        %v650 = vpop.f32.mrb[0].mxu0
        %v651 = vadd.f32 0.0, %v650
        %v652 = vpop.f32.mrb[0].mxu0
        %653 = vmatprep.mubr.f32.mxu0 0.0
        %654 = vmatmul.mubr.f32.gmra.mrb[0].mxu0 %v432
        %v655 = vpop.f32.mrb[0].mxu0
        %v656 = vadd.f32 0.0, %v655
        %v657 = vpop.f32.mrb[0].mxu0
        %658 = vdwg.mxu0
        %v659 = vlaneseq
        %v660 = vshrl.u32 %v659, 7
        %v661 = vadd.s32 %v660, 8
        %v662 = vadd.s32 %v660, 16
        %v663 = vadd.s32 %v660, 24
        %v664 = vadd.s32 %v660, 32
        %v665 = vadd.s32 %v660, 40
        %v666 = vadd.s32 %v660, 48
        %v667 = vadd.s32 %v660, 56
        %v668 = vlaneseq
        %v669 = vand.u32 %v668, 127
        %v670 = vmul.u32 %v669, 16
        %vm671 = vcmp.ge.s32.totalorder %v660, %v670
        %vm672 = vcmp.ge.s32.totalorder %v661, %v670
        %vm673 = vcmp.ge.s32.totalorder %v662, %v670
        %vm674 = vcmp.ge.s32.totalorder %v663, %v670
        %vm675 = vcmp.ge.s32.totalorder %v664, %v670
        %vm676 = vcmp.ge.s32.totalorder %v665, %v670
        %vm677 = vcmp.ge.s32.totalorder %v666, %v670
        %vm678 = vcmp.ge.s32.totalorder %v667, %v670
        %v679 = vadd.s32 %v670, 16
        %vm680 = vcmp.lt.s32.totalorder %v660, %v679
        %vm681 = vcmp.lt.s32.totalorder %v661, %v679
        %vm682 = vcmp.lt.s32.totalorder %v662, %v679
        %vm683 = vcmp.lt.s32.totalorder %v663, %v679
        %vm684 = vcmp.lt.s32.totalorder %v664, %v679
        %vm685 = vcmp.lt.s32.totalorder %v665, %v679
        %vm686 = vcmp.lt.s32.totalorder %v666, %v679
        %vm687 = vcmp.lt.s32.totalorder %v667, %v679
        %vm688 = vmand %vm671, %vm680
        %vm689 = vmand %vm672, %vm681
        %vm690 = vmand %vm673, %vm682
        %vm691 = vmand %vm674, %vm683
        %vm692 = vmand %vm675, %vm684
        %vm693 = vmand %vm676, %vm685
        %vm694 = vmand %vm677, %vm686
        %vm695 = vmand %vm678, %vm687
        %v696 = vsel %vm688, 1.0, 0.0
        %v697 = vsel %vm689, 1.0, 0.0
        %v698 = vsel %vm690, 1.0, 0.0
        %v699 = vsel %vm691, 1.0, 0.0
        %v700 = vsel %vm692, 1.0, 0.0
        %v701 = vsel %vm693, 1.0, 0.0
        %v702 = vsel %vm694, 1.0, 0.0
        %v703 = vsel %vm695, 1.0, 0.0
        %v704 = vadd.s32 %v660, 64
        %v705 = vadd.s32 %v660, 72
        %v706 = vadd.s32 %v660, 80
        %v707 = vadd.s32 %v660, 88
        %v708 = vadd.s32 %v660, 96
        %v709 = vadd.s32 %v660, 104
        %v710 = vadd.s32 %v660, 112
        %v711 = vadd.s32 %v660, 120
        %v712 = vmul.u32 %v660, 16
        %v713 = vmul.u32 %v661, 16
        %v714 = vmul.u32 %v662, 16
        %v715 = vmul.u32 %v663, 16
        %v716 = vmul.u32 %v664, 16
        %v717 = vmul.u32 %v665, 16
        %v718 = vmul.u32 %v666, 16
        %v719 = vmul.u32 %v667, 16
        %v720 = vmul.u32 %v704, 16
        %v721 = vmul.u32 %v705, 16
        %v722 = vmul.u32 %v706, 16
        %v723 = vmul.u32 %v707, 16
        %v724 = vmul.u32 %v708, 16
        %v725 = vmul.u32 %v709, 16
        %v726 = vmul.u32 %v710, 16
        %v727 = vmul.u32 %v711, 16
        %vm728 = vcmp.ge.s32.totalorder %v669, %v712
        %vm729 = vcmp.ge.s32.totalorder %v669, %v713
        %vm730 = vcmp.ge.s32.totalorder %v669, %v714
        %vm731 = vcmp.ge.s32.totalorder %v669, %v715
        %vm732 = vcmp.ge.s32.totalorder %v669, %v716
        %vm733 = vcmp.ge.s32.totalorder %v669, %v717
        %vm734 = vcmp.ge.s32.totalorder %v669, %v718
        %vm735 = vcmp.ge.s32.totalorder %v669, %v719
        %vm736 = vcmp.ge.s32.totalorder %v669, %v720
        %vm737 = vcmp.ge.s32.totalorder %v669, %v721
        %vm738 = vcmp.ge.s32.totalorder %v669, %v722
        %vm739 = vcmp.ge.s32.totalorder %v669, %v723
        %vm740 = vcmp.ge.s32.totalorder %v669, %v724
        %vm741 = vcmp.ge.s32.totalorder %v669, %v725
        %vm742 = vcmp.ge.s32.totalorder %v669, %v726
        %vm743 = vcmp.ge.s32.totalorder %v669, %v727
        %v744 = vadd.s32 %v712, 16
        %v745 = vadd.s32 %v713, 16
        %v746 = vadd.s32 %v714, 16
        %v747 = vadd.s32 %v715, 16
        %v748 = vadd.s32 %v716, 16
        %v749 = vadd.s32 %v717, 16
        %v750 = vadd.s32 %v718, 16
        %v751 = vadd.s32 %v719, 16
        %v752 = vadd.s32 %v720, 16
        %v753 = vadd.s32 %v721, 16
        %v754 = vadd.s32 %v722, 16
        %v755 = vadd.s32 %v723, 16
        %v756 = vadd.s32 %v724, 16
        %v757 = vadd.s32 %v725, 16
        %v758 = vadd.s32 %v726, 16
        %v759 = vadd.s32 %v727, 16
        %vm760 = vcmp.lt.s32.totalorder %v669, %v744
        %vm761 = vcmp.lt.s32.totalorder %v669, %v745
        %vm762 = vcmp.lt.s32.totalorder %v669, %v746
        %vm763 = vcmp.lt.s32.totalorder %v669, %v747
        %vm764 = vcmp.lt.s32.totalorder %v669, %v748
        %vm765 = vcmp.lt.s32.totalorder %v669, %v749
        %vm766 = vcmp.lt.s32.totalorder %v669, %v750
        %vm767 = vcmp.lt.s32.totalorder %v669, %v751
        %vm768 = vcmp.lt.s32.totalorder %v669, %v752
        %vm769 = vcmp.lt.s32.totalorder %v669, %v753
        %vm770 = vcmp.lt.s32.totalorder %v669, %v754
        %vm771 = vcmp.lt.s32.totalorder %v669, %v755
        %vm772 = vcmp.lt.s32.totalorder %v669, %v756
        %vm773 = vcmp.lt.s32.totalorder %v669, %v757
        %vm774 = vcmp.lt.s32.totalorder %v669, %v758
        %vm775 = vcmp.lt.s32.totalorder %v669, %v759
        %vm776 = vmand %vm728, %vm760
        %vm777 = vmand %vm729, %vm761
        %vm778 = vmand %vm730, %vm762
        %vm779 = vmand %vm731, %vm763
        %vm780 = vmand %vm732, %vm764
        %vm781 = vmand %vm733, %vm765
        %vm782 = vmand %vm734, %vm766
        %vm783 = vmand %vm735, %vm767
        %vm784 = vmand %vm736, %vm768
        %vm785 = vmand %vm737, %vm769
        %vm786 = vmand %vm738, %vm770
        %vm787 = vmand %vm739, %vm771
        %vm788 = vmand %vm740, %vm772
        %vm789 = vmand %vm741, %vm773
        %vm790 = vmand %vm742, %vm774
        %vm791 = vmand %vm743, %vm775
        %v792 = vsel %vm776, 1.0, 0.0
        %v793 = vsel %vm777, 1.0, 0.0
        %v794 = vsel %vm778, 1.0, 0.0
        %v795 = vsel %vm779, 1.0, 0.0
        %v796 = vsel %vm780, 1.0, 0.0
        %v797 = vsel %vm781, 1.0, 0.0
        %v798 = vsel %vm782, 1.0, 0.0
        %v799 = vsel %vm783, 1.0, 0.0
        %v800 = vsel %vm784, 1.0, 0.0
        %v801 = vsel %vm785, 1.0, 0.0
        %v802 = vsel %vm786, 1.0, 0.0
        %v803 = vsel %vm787, 1.0, 0.0
        %v804 = vsel %vm788, 1.0, 0.0
        %v805 = vsel %vm789, 1.0, 0.0
        %v806 = vsel %vm790, 1.0, 0.0
        %v807 = vsel %vm791, 1.0, 0.0
        %vm808 = vcmask 523264
        %v810 = vsel %vm808, %v501, 0
        %v813 = vsel %vm808, %v506, 0
        %v816 = vsel %vm808, %v511, 0
        %v819 = vsel %vm808, %v516, 0
        %v822 = vsel %vm808, %v521, 0
        %v825 = vsel %vm808, %v526, 0
        %v828 = vsel %vm808, %v531, 0
        %v831 = vsel %vm808, %v536, 0
        %v834 = vsel %vm808, %v541, 0
        %v837 = vsel %vm808, %v546, 0
        %v840 = vsel %vm808, %v551, 0
        %v843 = vsel %vm808, %v556, 0
        %v846 = vsel %vm808, %v561, 0
        %v849 = vsel %vm808, %v566, 0
        %v852 = vsel %vm808, %v571, 0
        %v855 = vsel %vm808, %v576, 0
        %v858 = vsel %vm808, %v581, 0
        %v861 = vsel %vm808, %v586, 0
        %v864 = vsel %vm808, %v591, 0
        %v867 = vsel %vm808, %v596, 0
        %v870 = vsel %vm808, %v601, 0
        %v873 = vsel %vm808, %v606, 0
        %v876 = vsel %vm808, %v611, 0
        %v879 = vsel %vm808, %v616, 0
        %v882 = vsel %vm808, %v621, 0
        %v885 = vsel %vm808, %v626, 0
        %v888 = vsel %vm808, %v631, 0
        %v891 = vsel %vm808, %v636, 0
        %v894 = vsel %vm808, %v641, 0
        %v897 = vsel %vm808, %v646, 0
        %v900 = vsel %vm808, %v651, 0
        %v903 = vsel %vm808, %v656, 0
        %905 = vmatprep.subr.mxu0 0.0
        %906 = vmatpush1.msra.mxu0 %v696
        %907 = vmatprep.subr.mxu0 0.0
        %908 = vmatpush1.msra.mxu0 %v697
        %909 = vmatprep.subr.mxu0 0.0
        %910 = vmatpush1.msra.mxu0 %v698
        %911 = vmatprep.subr.mxu0 0.0
        %912 = vmatpush1.msra.mxu0 %v699
        %913 = vmatprep.subr.mxu0 0.0
        %914 = vmatpush1.msra.mxu0 %v700
        %915 = vmatprep.subr.mxu0 0.0
        %916 = vmatpush1.msra.mxu0 %v701
        %917 = vmatprep.subr.mxu0 0.0
        %918 = vmatpush1.msra.mxu0 %v702
        %919 = vmatprep.subr.mxu0 0.0
        %920 = vmatpush1.msra.mxu0 %v703
        %921 = vmatprep.subr.mxu0 0.0
        %922 = vmatpush1.msra.mxu0 0.0
        %923 = vmatprep.subr.mxu0 0.0
        %924 = vmatpush1.msra.mxu0 0.0
        %925 = vmatprep.subr.mxu0 0.0
        %926 = vmatpush1.msra.mxu0 0.0
        %927 = vmatprep.subr.mxu0 0.0
        %928 = vmatpush1.msra.mxu0 0.0
        %929 = vmatprep.subr.mxu0 0.0
        %930 = vmatpush1.msra.mxu0 0.0
        %931 = vmatprep.subr.mxu0 0.0
        %932 = vmatpush1.msra.mxu0 0.0
        %933 = vmatprep.subr.mxu0 0.0
        %934 = vmatpush1.msra.mxu0 0.0
        %935 = vmatprep.subr.mxu0 0.0
        %936 = vmatpush1.msra.mxu0 0.0
        %937 = vmatprep.subr.mxu0 0.0
        %938 = vmatpush1.msra.mxu0 0.0
        %939 = vmatprep.subr.mxu0 0.0
        %940 = vmatpush1.msra.mxu0 0.0
        %941 = vmatprep.subr.mxu0 0.0
        %942 = vmatpush1.msra.mxu0 0.0
        %943 = vmatprep.subr.mxu0 0.0
        %944 = vmatpush1.msra.mxu0 0.0
        %945 = vmatprep.subr.mxu0 0.0
        %946 = vmatpush1.msra.mxu0 0.0
        %947 = vmatprep.subr.mxu0 0.0
        %948 = vmatpush1.msra.mxu0 0.0
        %949 = vmatprep.subr.mxu0 0.0
        %950 = vmatpush1.msra.mxu0 0.0
        %951 = vmatprep.subr.mxu0 0.0
        %952 = vmatpush1.msra.mxu0 0.0
        %953 = vmatprep.subr.mxu0 0.0
        %954 = vmatpush1.msra.mxu0 0.0
        %955 = vmatprep.subr.mxu0 0.0
        %956 = vmatpush1.msra.mxu0 0.0
        %957 = vmatprep.subr.mxu0 0.0
        %958 = vmatpush1.msra.mxu0 0.0
        %959 = vmatprep.subr.mxu0 0.0
        %960 = vmatpush1.msra.mxu0 0.0
        %961 = vmatprep.subr.mxu0 0.0
        %962 = vmatpush1.msra.mxu0 0.0
        %963 = vmatprep.subr.mxu0 0.0
        %964 = vmatpush1.msra.mxu0 0.0
        %965 = vmatprep.subr.mxu0 0.0
        %966 = vmatpush1.msra.mxu0 0.0
        %967 = vmatprep.subr.mxu0 0.0
        %968 = vmatpush1.msra.mxu0 0.0
        %969 = vmatprep.mubr.f32.mxu0 0.0
        %970 = vmatmul.mubr.f32.gmra.mrb[0].mxu0 %v810
        %v971 = vpop.f32.mrb[0].mxu0
        %v972 = vadd.f32 0.0, %v971
        %v973 = vpop.f32.mrb[0].mxu0
        %974 = vmatprep.mubr.f32.mxu0 0.0
        %975 = vmatmul.mubr.f32.gmra.mrb[0].mxu0 %v813
        %v976 = vpop.f32.mrb[0].mxu0
        %v977 = vadd.f32 0.0, %v976
        %v978 = vpop.f32.mrb[0].mxu0
        %979 = vmatprep.mubr.f32.mxu0 0.0
        %980 = vmatmul.mubr.f32.gmra.mrb[0].mxu0 %v816
        %v981 = vpop.f32.mrb[0].mxu0
        %v982 = vadd.f32 0.0, %v981
        %v983 = vpop.f32.mrb[0].mxu0
        %984 = vmatprep.mubr.f32.mxu0 0.0
        %985 = vmatmul.mubr.f32.gmra.mrb[0].mxu0 %v819
        %v986 = vpop.f32.mrb[0].mxu0
        %v987 = vadd.f32 0.0, %v986
        %v988 = vpop.f32.mrb[0].mxu0
        %989 = vmatprep.mubr.f32.mxu0 0.0
        %990 = vmatmul.mubr.f32.gmra.mrb[0].mxu0 %v822
        %v991 = vpop.f32.mrb[0].mxu0
        %v992 = vadd.f32 0.0, %v991
        %v993 = vpop.f32.mrb[0].mxu0
        %994 = vmatprep.mubr.f32.mxu0 0.0
        %995 = vmatmul.mubr.f32.gmra.mrb[0].mxu0 %v825
        %v996 = vpop.f32.mrb[0].mxu0
        %v997 = vadd.f32 0.0, %v996
        %v998 = vpop.f32.mrb[0].mxu0
        %999 = vmatprep.mubr.f32.mxu0 0.0
        %1000 = vmatmul.mubr.f32.gmra.mrb[0].mxu0 %v828
        %v1001 = vpop.f32.mrb[0].mxu0
        %v1002 = vadd.f32 0.0, %v1001
        %v1003 = vpop.f32.mrb[0].mxu0
        %1004 = vmatprep.mubr.f32.mxu0 0.0
        %1005 = vmatmul.mubr.f32.gmra.mrb[0].mxu0 %v831
        %v1006 = vpop.f32.mrb[0].mxu0
        %v1007 = vadd.f32 0.0, %v1006
        %v1008 = vpop.f32.mrb[0].mxu0
        %1009 = vmatprep.mubr.f32.mxu0 0.0
        %1010 = vmatmul.mubr.f32.gmra.mrb[0].mxu0 %v834
        %v1011 = vpop.f32.mrb[0].mxu0
        %v1012 = vadd.f32 0.0, %v1011
        %v1013 = vpop.f32.mrb[0].mxu0
        %1014 = vmatprep.mubr.f32.mxu0 0.0
        %1015 = vmatmul.mubr.f32.gmra.mrb[0].mxu0 %v837
        %v1016 = vpop.f32.mrb[0].mxu0
        %v1017 = vadd.f32 0.0, %v1016
        %v1018 = vpop.f32.mrb[0].mxu0
        %1019 = vmatprep.mubr.f32.mxu0 0.0
        %1020 = vmatmul.mubr.f32.gmra.mrb[0].mxu0 %v840
        %v1021 = vpop.f32.mrb[0].mxu0
        %v1022 = vadd.f32 0.0, %v1021
        %v1023 = vpop.f32.mrb[0].mxu0
        %1024 = vmatprep.mubr.f32.mxu0 0.0
        %1025 = vmatmul.mubr.f32.gmra.mrb[0].mxu0 %v843
        %v1026 = vpop.f32.mrb[0].mxu0
        %v1027 = vadd.f32 0.0, %v1026
        %v1028 = vpop.f32.mrb[0].mxu0
        %1029 = vmatprep.mubr.f32.mxu0 0.0
        %1030 = vmatmul.mubr.f32.gmra.mrb[0].mxu0 %v846
        %v1031 = vpop.f32.mrb[0].mxu0
        %v1032 = vadd.f32 0.0, %v1031
        %v1033 = vpop.f32.mrb[0].mxu0
        %1034 = vmatprep.mubr.f32.mxu0 0.0
        %1035 = vmatmul.mubr.f32.gmra.mrb[0].mxu0 %v849
        %v1036 = vpop.f32.mrb[0].mxu0
        %v1037 = vadd.f32 0.0, %v1036
        %v1038 = vpop.f32.mrb[0].mxu0
        %1039 = vmatprep.mubr.f32.mxu0 0.0
        %1040 = vmatmul.mubr.f32.gmra.mrb[0].mxu0 %v852
        %v1041 = vpop.f32.mrb[0].mxu0
        %v1042 = vadd.f32 0.0, %v1041
        %v1043 = vpop.f32.mrb[0].mxu0
        %1044 = vmatprep.mubr.f32.mxu0 0.0
        %1045 = vmatmul.mubr.f32.gmra.mrb[0].mxu0 %v855
        %v1046 = vpop.f32.mrb[0].mxu0
        %v1047 = vadd.f32 0.0, %v1046
        %v1048 = vpop.f32.mrb[0].mxu0
        %1049 = vmatprep.mubr.f32.mxu0 0.0
        %1050 = vmatmul.mubr.f32.gmra.mrb[0].mxu0 %v858
        %v1051 = vpop.f32.mrb[0].mxu0
        %v1052 = vadd.f32 0.0, %v1051
        %v1053 = vpop.f32.mrb[0].mxu0
        %1054 = vmatprep.mubr.f32.mxu0 0.0
        %1055 = vmatmul.mubr.f32.gmra.mrb[0].mxu0 %v861
        %v1056 = vpop.f32.mrb[0].mxu0
        %v1057 = vadd.f32 0.0, %v1056
        %v1058 = vpop.f32.mrb[0].mxu0
        %1059 = vmatprep.mubr.f32.mxu0 0.0
        %1060 = vmatmul.mubr.f32.gmra.mrb[0].mxu0 %v864
        %v1061 = vpop.f32.mrb[0].mxu0
        %v1062 = vadd.f32 0.0, %v1061
        %v1063 = vpop.f32.mrb[0].mxu0
        %1064 = vmatprep.mubr.f32.mxu0 0.0
        %1065 = vmatmul.mubr.f32.gmra.mrb[0].mxu0 %v867
        %v1066 = vpop.f32.mrb[0].mxu0
        %v1067 = vadd.f32 0.0, %v1066
        %v1068 = vpop.f32.mrb[0].mxu0
        %1069 = vmatprep.mubr.f32.mxu0 0.0
        %1070 = vmatmul.mubr.f32.gmra.mrb[0].mxu0 %v870
        %v1071 = vpop.f32.mrb[0].mxu0
        %v1072 = vadd.f32 0.0, %v1071
        %v1073 = vpop.f32.mrb[0].mxu0
        %1074 = vmatprep.mubr.f32.mxu0 0.0
        %1075 = vmatmul.mubr.f32.gmra.mrb[0].mxu0 %v873
        %v1076 = vpop.f32.mrb[0].mxu0
        %v1077 = vadd.f32 0.0, %v1076
        %v1078 = vpop.f32.mrb[0].mxu0
        %1079 = vmatprep.mubr.f32.mxu0 0.0
        %1080 = vmatmul.mubr.f32.gmra.mrb[0].mxu0 %v876
        %v1081 = vpop.f32.mrb[0].mxu0
        %v1082 = vadd.f32 0.0, %v1081
        %v1083 = vpop.f32.mrb[0].mxu0
        %1084 = vmatprep.mubr.f32.mxu0 0.0
        %1085 = vmatmul.mubr.f32.gmra.mrb[0].mxu0 %v879
        %v1086 = vpop.f32.mrb[0].mxu0
        %v1087 = vadd.f32 0.0, %v1086
        %v1088 = vpop.f32.mrb[0].mxu0
        %1089 = vmatprep.mubr.f32.mxu0 0.0
        %1090 = vmatmul.mubr.f32.gmra.mrb[0].mxu0 %v882
        %v1091 = vpop.f32.mrb[0].mxu0
        %v1092 = vadd.f32 0.0, %v1091
        %v1093 = vpop.f32.mrb[0].mxu0
        %1094 = vmatprep.mubr.f32.mxu0 0.0
        %1095 = vmatmul.mubr.f32.gmra.mrb[0].mxu0 %v885
        %v1096 = vpop.f32.mrb[0].mxu0
        %v1097 = vadd.f32 0.0, %v1096
        %v1098 = vpop.f32.mrb[0].mxu0
        %1099 = vmatprep.mubr.f32.mxu0 0.0
        %1100 = vmatmul.mubr.f32.gmra.mrb[0].mxu0 %v888
        %v1101 = vpop.f32.mrb[0].mxu0
        %v1102 = vadd.f32 0.0, %v1101
        %v1103 = vpop.f32.mrb[0].mxu0
        %1104 = vmatprep.mubr.f32.mxu0 0.0
        %1105 = vmatmul.mubr.f32.gmra.mrb[0].mxu0 %v891
        %v1106 = vpop.f32.mrb[0].mxu0
        %v1107 = vadd.f32 0.0, %v1106
        %v1108 = vpop.f32.mrb[0].mxu0
        %1109 = vmatprep.mubr.f32.mxu0 0.0
        %1110 = vmatmul.mubr.f32.gmra.mrb[0].mxu0 %v894
        %v1111 = vpop.f32.mrb[0].mxu0
        %v1112 = vadd.f32 0.0, %v1111
        %v1113 = vpop.f32.mrb[0].mxu0
        %1114 = vmatprep.mubr.f32.mxu0 0.0
        %1115 = vmatmul.mubr.f32.gmra.mrb[0].mxu0 %v897
        %v1116 = vpop.f32.mrb[0].mxu0
        %v1117 = vadd.f32 0.0, %v1116
        %v1118 = vpop.f32.mrb[0].mxu0
        %1119 = vmatprep.mubr.f32.mxu0 0.0
        %1120 = vmatmul.mubr.f32.gmra.mrb[0].mxu0 %v900
        %v1121 = vpop.f32.mrb[0].mxu0
        %v1122 = vadd.f32 0.0, %v1121
        %v1123 = vpop.f32.mrb[0].mxu0
        %1124 = vmatprep.mubr.f32.mxu0 0.0
        %1125 = vmatmul.mubr.f32.gmra.mrb[0].mxu0 %v903
        %v1126 = vpop.f32.mrb[0].mxu0
        %v1127 = vadd.f32 0.0, %v1126
        %v1128 = vpop.f32.mrb[0].mxu0
        %1129 = vdwg.mxu0
        %v1130 = vmul.f32 %v972, 0.0625
        %v1131 = vmul.f32 %v977, 0.0625
        %v1132 = vmul.f32 %v982, 0.0625
        %v1133 = vmul.f32 %v987, 0.0625
        %v1134 = vmul.f32 %v992, 0.0625
        %v1135 = vmul.f32 %v997, 0.0625
        %v1136 = vmul.f32 %v1002, 0.0625
        %v1137 = vmul.f32 %v1007, 0.0625
        %v1138 = vmul.f32 %v1012, 0.0625
        %v1139 = vmul.f32 %v1017, 0.0625
        %v1140 = vmul.f32 %v1022, 0.0625
        %v1141 = vmul.f32 %v1027, 0.0625
        %v1142 = vmul.f32 %v1032, 0.0625
        %v1143 = vmul.f32 %v1037, 0.0625
        %v1144 = vmul.f32 %v1042, 0.0625
        %v1145 = vmul.f32 %v1047, 0.0625
        %v1146 = vmul.f32 %v1052, 0.0625
        %v1147 = vmul.f32 %v1057, 0.0625
        %v1148 = vmul.f32 %v1062, 0.0625
        %v1149 = vmul.f32 %v1067, 0.0625
        %v1150 = vmul.f32 %v1072, 0.0625
        %v1151 = vmul.f32 %v1077, 0.0625
        %v1152 = vmul.f32 %v1082, 0.0625
        %v1153 = vmul.f32 %v1087, 0.0625
        %v1154 = vmul.f32 %v1092, 0.0625
        %v1155 = vmul.f32 %v1097, 0.0625
        %v1156 = vmul.f32 %v1102, 0.0625
        %v1157 = vmul.f32 %v1107, 0.0625
        %v1158 = vmul.f32 %v1112, 0.0625
        %v1159 = vmul.f32 %v1117, 0.0625
        %v1160 = vmul.f32 %v1122, 0.0625
        %v1161 = vmul.f32 %v1127, 0.0625
        %1162 = vmatprep.subr.mxu0 0.0
        %1163 = vmatpush1.msra.mxu0 %v792
        %1164 = vmatprep.subr.mxu0 0.0
        %1165 = vmatpush1.msra.mxu0 %v793
        %1166 = vmatprep.subr.mxu0 0.0
        %1167 = vmatpush1.msra.mxu0 %v794
        %1168 = vmatprep.subr.mxu0 0.0
        %1169 = vmatpush1.msra.mxu0 %v795
        %1170 = vmatprep.subr.mxu0 0.0
        %1171 = vmatpush1.msra.mxu0 %v796
        %1172 = vmatprep.subr.mxu0 0.0
        %1173 = vmatpush1.msra.mxu0 %v797
        %1174 = vmatprep.subr.mxu0 0.0
        %1175 = vmatpush1.msra.mxu0 %v798
        %1176 = vmatprep.subr.mxu0 0.0
        %1177 = vmatpush1.msra.mxu0 %v799
        %1178 = vmatprep.subr.mxu0 0.0
        %1179 = vmatpush1.msra.mxu0 %v800
        %1180 = vmatprep.subr.mxu0 0.0
        %1181 = vmatpush1.msra.mxu0 %v801
        %1182 = vmatprep.subr.mxu0 0.0
        %1183 = vmatpush1.msra.mxu0 %v802
        %1184 = vmatprep.subr.mxu0 0.0
        %1185 = vmatpush1.msra.mxu0 %v803
        %1186 = vmatprep.subr.mxu0 0.0
        %1187 = vmatpush1.msra.mxu0 %v804
        %1188 = vmatprep.subr.mxu0 0.0
        %1189 = vmatpush1.msra.mxu0 %v805
        %1190 = vmatprep.subr.mxu0 0.0
        %1191 = vmatpush1.msra.mxu0 %v806
        %1192 = vmatprep.subr.mxu0 0.0
        %1193 = vmatpush1.msra.mxu0 %v807
        %1194 = vmatprep.subr.mxu0 0.0
        %1195 = vmatpush1.msra.mxu0 0.0
        %1196 = vmatprep.subr.mxu0 0.0
        %1197 = vmatpush1.msra.mxu0 0.0
        %1198 = vmatprep.subr.mxu0 0.0
        %1199 = vmatpush1.msra.mxu0 0.0
        %1200 = vmatprep.subr.mxu0 0.0
        %1201 = vmatpush1.msra.mxu0 0.0
        %1202 = vmatprep.subr.mxu0 0.0
        %1203 = vmatpush1.msra.mxu0 0.0
        %1204 = vmatprep.subr.mxu0 0.0
        %1205 = vmatpush1.msra.mxu0 0.0
        %1206 = vmatprep.subr.mxu0 0.0
        %1207 = vmatpush1.msra.mxu0 0.0
        %1208 = vmatprep.subr.mxu0 0.0
        %1209 = vmatpush1.msra.mxu0 0.0
        %1210 = vmatprep.subr.mxu0 0.0
        %1211 = vmatpush1.msra.mxu0 0.0
        %1212 = vmatprep.subr.mxu0 0.0
        %1213 = vmatpush1.msra.mxu0 0.0
        %1214 = vmatprep.subr.mxu0 0.0
        %1215 = vmatpush1.msra.mxu0 0.0
        %1216 = vmatprep.subr.mxu0 0.0
        %1217 = vmatpush1.msra.mxu0 0.0
        %1218 = vmatprep.subr.mxu0 0.0
        %1219 = vmatpush1.msra.mxu0 0.0
        %1220 = vmatprep.subr.mxu0 0.0
        %1221 = vmatpush1.msra.mxu0 0.0
        %1222 = vmatprep.subr.mxu0 0.0
        %1223 = vmatpush1.msra.mxu0 0.0
        %1224 = vmatprep.subr.mxu0 0.0
        %1225 = vmatpush1.msra.mxu0 0.0
        %1226 = vmatprep.mubr.f32.mxu0 0.0
        %1227 = vmatmul.mubr.f32.gmra.mrb[0].mxu0 %v1130
        %v1228 = vpop.f32.mrb[0].mxu0
        %v1229 = vadd.f32 0.0, %v1228
        %v1230 = vpop.f32.mrb[0].mxu0
        %1231 = vmatprep.mubr.f32.mxu0 0.0
        %1232 = vmatmul.mubr.f32.gmra.mrb[0].mxu0 %v1131
        %v1233 = vpop.f32.mrb[0].mxu0
        %v1234 = vadd.f32 0.0, %v1233
        %v1235 = vpop.f32.mrb[0].mxu0
        %1236 = vmatprep.mubr.f32.mxu0 0.0
        %1237 = vmatmul.mubr.f32.gmra.mrb[0].mxu0 %v1132
        %v1238 = vpop.f32.mrb[0].mxu0
        %v1239 = vadd.f32 0.0, %v1238
        %v1240 = vpop.f32.mrb[0].mxu0
        %1241 = vmatprep.mubr.f32.mxu0 0.0
        %1242 = vmatmul.mubr.f32.gmra.mrb[0].mxu0 %v1133
        %v1243 = vpop.f32.mrb[0].mxu0
        %v1244 = vadd.f32 0.0, %v1243
        %v1245 = vpop.f32.mrb[0].mxu0
        %1246 = vmatprep.mubr.f32.mxu0 0.0
        %1247 = vmatmul.mubr.f32.gmra.mrb[0].mxu0 %v1134
        %v1248 = vpop.f32.mrb[0].mxu0
        %v1249 = vadd.f32 0.0, %v1248
        %v1250 = vpop.f32.mrb[0].mxu0
        %1251 = vmatprep.mubr.f32.mxu0 0.0
        %1252 = vmatmul.mubr.f32.gmra.mrb[0].mxu0 %v1135
        %v1253 = vpop.f32.mrb[0].mxu0
        %v1254 = vadd.f32 0.0, %v1253
        %v1255 = vpop.f32.mrb[0].mxu0
        %1256 = vmatprep.mubr.f32.mxu0 0.0
        %1257 = vmatmul.mubr.f32.gmra.mrb[0].mxu0 %v1136
        %v1258 = vpop.f32.mrb[0].mxu0
        %v1259 = vadd.f32 0.0, %v1258
        %v1260 = vpop.f32.mrb[0].mxu0
        %1261 = vmatprep.mubr.f32.mxu0 0.0
        %1262 = vmatmul.mubr.f32.gmra.mrb[0].mxu0 %v1137
        %v1263 = vpop.f32.mrb[0].mxu0
        %v1264 = vadd.f32 0.0, %v1263
        %v1265 = vpop.f32.mrb[0].mxu0
        %1266 = vmatprep.mubr.f32.mxu0 0.0
        %1267 = vmatmul.mubr.f32.gmra.mrb[0].mxu0 %v1138
        %v1268 = vpop.f32.mrb[0].mxu0
        %v1269 = vadd.f32 0.0, %v1268
        %v1270 = vpop.f32.mrb[0].mxu0
        %1271 = vmatprep.mubr.f32.mxu0 0.0
        %1272 = vmatmul.mubr.f32.gmra.mrb[0].mxu0 %v1139
        %v1273 = vpop.f32.mrb[0].mxu0
        %v1274 = vadd.f32 0.0, %v1273
        %v1275 = vpop.f32.mrb[0].mxu0
        %1276 = vmatprep.mubr.f32.mxu0 0.0
        %1277 = vmatmul.mubr.f32.gmra.mrb[0].mxu0 %v1140
        %v1278 = vpop.f32.mrb[0].mxu0
        %v1279 = vadd.f32 0.0, %v1278
        %v1280 = vpop.f32.mrb[0].mxu0
        %1281 = vmatprep.mubr.f32.mxu0 0.0
        %1282 = vmatmul.mubr.f32.gmra.mrb[0].mxu0 %v1141
        %v1283 = vpop.f32.mrb[0].mxu0
        %v1284 = vadd.f32 0.0, %v1283
        %v1285 = vpop.f32.mrb[0].mxu0
        %1286 = vmatprep.mubr.f32.mxu0 0.0
        %1287 = vmatmul.mubr.f32.gmra.mrb[0].mxu0 %v1142
        %v1288 = vpop.f32.mrb[0].mxu0
        %v1289 = vadd.f32 0.0, %v1288
        %v1290 = vpop.f32.mrb[0].mxu0
        %1291 = vmatprep.mubr.f32.mxu0 0.0
        %1292 = vmatmul.mubr.f32.gmra.mrb[0].mxu0 %v1143
        %v1293 = vpop.f32.mrb[0].mxu0
        %v1294 = vadd.f32 0.0, %v1293
        %v1295 = vpop.f32.mrb[0].mxu0
        %1296 = vmatprep.mubr.f32.mxu0 0.0
        %1297 = vmatmul.mubr.f32.gmra.mrb[0].mxu0 %v1144
        %v1298 = vpop.f32.mrb[0].mxu0
        %v1299 = vadd.f32 0.0, %v1298
        %v1300 = vpop.f32.mrb[0].mxu0
        %1301 = vmatprep.mubr.f32.mxu0 0.0
        %1302 = vmatmul.mubr.f32.gmra.mrb[0].mxu0 %v1145
        %v1303 = vpop.f32.mrb[0].mxu0
        %v1304 = vadd.f32 0.0, %v1303
        %v1305 = vpop.f32.mrb[0].mxu0
        %1306 = vmatprep.mubr.f32.mxu0 0.0
        %1307 = vmatmul.mubr.f32.gmra.mrb[0].mxu0 %v1146
        %v1308 = vpop.f32.mrb[0].mxu0
        %v1309 = vadd.f32 0.0, %v1308
        %v1310 = vpop.f32.mrb[0].mxu0
        %1311 = vmatprep.mubr.f32.mxu0 0.0
        %1312 = vmatmul.mubr.f32.gmra.mrb[0].mxu0 %v1147
        %v1313 = vpop.f32.mrb[0].mxu0
        %v1314 = vadd.f32 0.0, %v1313
        %v1315 = vpop.f32.mrb[0].mxu0
        %1316 = vmatprep.mubr.f32.mxu0 0.0
        %1317 = vmatmul.mubr.f32.gmra.mrb[0].mxu0 %v1148
        %v1318 = vpop.f32.mrb[0].mxu0
        %v1319 = vadd.f32 0.0, %v1318
        %v1320 = vpop.f32.mrb[0].mxu0
        %1321 = vmatprep.mubr.f32.mxu0 0.0
        %1322 = vmatmul.mubr.f32.gmra.mrb[0].mxu0 %v1149
        %v1323 = vpop.f32.mrb[0].mxu0
        %v1324 = vadd.f32 0.0, %v1323
        %v1325 = vpop.f32.mrb[0].mxu0
        %1326 = vmatprep.mubr.f32.mxu0 0.0
        %1327 = vmatmul.mubr.f32.gmra.mrb[0].mxu0 %v1150
        %v1328 = vpop.f32.mrb[0].mxu0
        %v1329 = vadd.f32 0.0, %v1328
        %v1330 = vpop.f32.mrb[0].mxu0
        %1331 = vmatprep.mubr.f32.mxu0 0.0
        %1332 = vmatmul.mubr.f32.gmra.mrb[0].mxu0 %v1151
        %v1333 = vpop.f32.mrb[0].mxu0
        %v1334 = vadd.f32 0.0, %v1333
        %v1335 = vpop.f32.mrb[0].mxu0
        %1336 = vmatprep.mubr.f32.mxu0 0.0
        %1337 = vmatmul.mubr.f32.gmra.mrb[0].mxu0 %v1152
        %v1338 = vpop.f32.mrb[0].mxu0
        %v1339 = vadd.f32 0.0, %v1338
        %v1340 = vpop.f32.mrb[0].mxu0
        %1341 = vmatprep.mubr.f32.mxu0 0.0
        %1342 = vmatmul.mubr.f32.gmra.mrb[0].mxu0 %v1153
        %v1343 = vpop.f32.mrb[0].mxu0
        %v1344 = vadd.f32 0.0, %v1343
        %v1345 = vpop.f32.mrb[0].mxu0
        %1346 = vmatprep.mubr.f32.mxu0 0.0
        %1347 = vmatmul.mubr.f32.gmra.mrb[0].mxu0 %v1154
        %v1348 = vpop.f32.mrb[0].mxu0
        %v1349 = vadd.f32 0.0, %v1348
        %v1350 = vpop.f32.mrb[0].mxu0
        %1351 = vmatprep.mubr.f32.mxu0 0.0
        %1352 = vmatmul.mubr.f32.gmra.mrb[0].mxu0 %v1155
        %v1353 = vpop.f32.mrb[0].mxu0
        %v1354 = vadd.f32 0.0, %v1353
        %v1355 = vpop.f32.mrb[0].mxu0
        %1356 = vmatprep.mubr.f32.mxu0 0.0
        %1357 = vmatmul.mubr.f32.gmra.mrb[0].mxu0 %v1156
        %v1358 = vpop.f32.mrb[0].mxu0
        %v1359 = vadd.f32 0.0, %v1358
        %v1360 = vpop.f32.mrb[0].mxu0
        %1361 = vmatprep.mubr.f32.mxu0 0.0
        %1362 = vmatmul.mubr.f32.gmra.mrb[0].mxu0 %v1157
        %v1363 = vpop.f32.mrb[0].mxu0
        %v1364 = vadd.f32 0.0, %v1363
        %v1365 = vpop.f32.mrb[0].mxu0
        %1366 = vmatprep.mubr.f32.mxu0 0.0
        %1367 = vmatmul.mubr.f32.gmra.mrb[0].mxu0 %v1158
        %v1368 = vpop.f32.mrb[0].mxu0
        %v1369 = vadd.f32 0.0, %v1368
        %v1370 = vpop.f32.mrb[0].mxu0
        %1371 = vmatprep.mubr.f32.mxu0 0.0
        %1372 = vmatmul.mubr.f32.gmra.mrb[0].mxu0 %v1159
        %v1373 = vpop.f32.mrb[0].mxu0
        %v1374 = vadd.f32 0.0, %v1373
        %v1375 = vpop.f32.mrb[0].mxu0
        %1376 = vmatprep.mubr.f32.mxu0 0.0
        %1377 = vmatmul.mubr.f32.gmra.mrb[0].mxu0 %v1160
        %v1378 = vpop.f32.mrb[0].mxu0
        %v1379 = vadd.f32 0.0, %v1378
        %v1380 = vpop.f32.mrb[0].mxu0
        %1381 = vmatprep.mubr.f32.mxu0 0.0
        %1382 = vmatmul.mubr.f32.gmra.mrb[0].mxu0 %v1161
        %v1383 = vpop.f32.mrb[0].mxu0
        %v1384 = vadd.f32 0.0, %v1383
        %v1385 = vpop.f32.mrb[0].mxu0
        %1386 = vdwg.mxu0
        %v1387 = vsub.f32 %v501, %v1229
        %v1388 = vsub.f32 %v506, %v1234
        %v1389 = vsub.f32 %v511, %v1239
        %v1390 = vsub.f32 %v516, %v1244
        %v1391 = vsub.f32 %v521, %v1249
        %v1392 = vsub.f32 %v526, %v1254
        %v1393 = vsub.f32 %v531, %v1259
        %v1394 = vsub.f32 %v536, %v1264
        %v1395 = vsub.f32 %v541, %v1269
        %v1396 = vsub.f32 %v546, %v1274
        %v1397 = vsub.f32 %v551, %v1279
        %v1398 = vsub.f32 %v556, %v1284
        %v1399 = vsub.f32 %v561, %v1289
        %v1400 = vsub.f32 %v566, %v1294
        %v1401 = vsub.f32 %v571, %v1299
        %v1402 = vsub.f32 %v576, %v1304
        %v1403 = vsub.f32 %v581, %v1309
        %v1404 = vsub.f32 %v586, %v1314
        %v1405 = vsub.f32 %v591, %v1319
        %v1406 = vsub.f32 %v596, %v1324
        %v1407 = vsub.f32 %v601, %v1329
        %v1408 = vsub.f32 %v606, %v1334
        %v1409 = vsub.f32 %v611, %v1339
        %v1410 = vsub.f32 %v616, %v1344
        %v1411 = vsub.f32 %v621, %v1349
        %v1412 = vsub.f32 %v626, %v1354
        %v1413 = vsub.f32 %v631, %v1359
        %v1414 = vsub.f32 %v636, %v1364
        %v1415 = vsub.f32 %v641, %v1369
        %v1416 = vsub.f32 %v646, %v1374
        %v1417 = vsub.f32 %v651, %v1379
        %v1418 = vsub.f32 %v656, %v1384
        %v1419 = vmul.f32 %v1387, %v1387
        %v1420 = vmul.f32 %v1388, %v1388
        %v1421 = vmul.f32 %v1389, %v1389
        %v1422 = vmul.f32 %v1390, %v1390
        %v1423 = vmul.f32 %v1391, %v1391
        %v1424 = vmul.f32 %v1392, %v1392
        %v1425 = vmul.f32 %v1393, %v1393
        %v1426 = vmul.f32 %v1394, %v1394
        %v1427 = vmul.f32 %v1395, %v1395
        %v1428 = vmul.f32 %v1396, %v1396
        %v1429 = vmul.f32 %v1397, %v1397
        %v1430 = vmul.f32 %v1398, %v1398
        %v1431 = vmul.f32 %v1399, %v1399
        %v1432 = vmul.f32 %v1400, %v1400
        %v1433 = vmul.f32 %v1401, %v1401
        %v1434 = vmul.f32 %v1402, %v1402
        %v1435 = vmul.f32 %v1403, %v1403
        %v1436 = vmul.f32 %v1404, %v1404
        %v1437 = vmul.f32 %v1405, %v1405
        %v1438 = vmul.f32 %v1406, %v1406
        %v1439 = vmul.f32 %v1407, %v1407
        %v1440 = vmul.f32 %v1408, %v1408
        %v1441 = vmul.f32 %v1409, %v1409
        %v1442 = vmul.f32 %v1410, %v1410
        %v1443 = vmul.f32 %v1411, %v1411
        %v1444 = vmul.f32 %v1412, %v1412
        %v1445 = vmul.f32 %v1413, %v1413
        %v1446 = vmul.f32 %v1414, %v1414
        %v1447 = vmul.f32 %v1415, %v1415
        %v1448 = vmul.f32 %v1416, %v1416
        %v1449 = vmul.f32 %v1417, %v1417
        %v1450 = vmul.f32 %v1418, %v1418
        %v1452 = vsel %vm808, %v1419, 0
        %v1455 = vsel %vm808, %v1420, 0
        %v1458 = vsel %vm808, %v1421, 0
        %v1461 = vsel %vm808, %v1422, 0
        %v1464 = vsel %vm808, %v1423, 0
        %v1467 = vsel %vm808, %v1424, 0
        %v1470 = vsel %vm808, %v1425, 0
        %v1473 = vsel %vm808, %v1426, 0
        %v1476 = vsel %vm808, %v1427, 0
        %v1479 = vsel %vm808, %v1428, 0
        %v1482 = vsel %vm808, %v1429, 0
        %v1485 = vsel %vm808, %v1430, 0
        %v1488 = vsel %vm808, %v1431, 0
        %v1491 = vsel %vm808, %v1432, 0
        %v1494 = vsel %vm808, %v1433, 0
        %v1497 = vsel %vm808, %v1434, 0
        %v1500 = vsel %vm808, %v1435, 0
        %v1503 = vsel %vm808, %v1436, 0
        %v1506 = vsel %vm808, %v1437, 0
        %v1509 = vsel %vm808, %v1438, 0
        %v1512 = vsel %vm808, %v1439, 0
        %v1515 = vsel %vm808, %v1440, 0
        %v1518 = vsel %vm808, %v1441, 0
        %v1521 = vsel %vm808, %v1442, 0
        %v1524 = vsel %vm808, %v1443, 0
        %v1527 = vsel %vm808, %v1444, 0
        %v1530 = vsel %vm808, %v1445, 0
        %v1533 = vsel %vm808, %v1446, 0
        %v1536 = vsel %vm808, %v1447, 0
        %v1539 = vsel %vm808, %v1448, 0
        %v1542 = vsel %vm808, %v1449, 0
        %v1545 = vsel %vm808, %v1450, 0
        %1547 = vmatprep.subr.mxu0 0.0
        %1548 = vmatpush1.msra.mxu0 %v696
        %1549 = vmatprep.subr.mxu0 0.0
        %1550 = vmatpush1.msra.mxu0 %v697
        %1551 = vmatprep.subr.mxu0 0.0
        %1552 = vmatpush1.msra.mxu0 %v698
        %1553 = vmatprep.subr.mxu0 0.0
        %1554 = vmatpush1.msra.mxu0 %v699
        %1555 = vmatprep.subr.mxu0 0.0
        %1556 = vmatpush1.msra.mxu0 %v700
        %1557 = vmatprep.subr.mxu0 0.0
        %1558 = vmatpush1.msra.mxu0 %v701
        %1559 = vmatprep.subr.mxu0 0.0
        %1560 = vmatpush1.msra.mxu0 %v702
        %1561 = vmatprep.subr.mxu0 0.0
        %1562 = vmatpush1.msra.mxu0 %v703
        %1563 = vmatprep.subr.mxu0 0.0
        %1564 = vmatpush1.msra.mxu0 0.0
        %1565 = vmatprep.subr.mxu0 0.0
        %1566 = vmatpush1.msra.mxu0 0.0
        %1567 = vmatprep.subr.mxu0 0.0
        %1568 = vmatpush1.msra.mxu0 0.0
        %1569 = vmatprep.subr.mxu0 0.0
        %1570 = vmatpush1.msra.mxu0 0.0
        %1571 = vmatprep.subr.mxu0 0.0
        %1572 = vmatpush1.msra.mxu0 0.0
        %1573 = vmatprep.subr.mxu0 0.0
        %1574 = vmatpush1.msra.mxu0 0.0
        %1575 = vmatprep.subr.mxu0 0.0
        %1576 = vmatpush1.msra.mxu0 0.0
        %1577 = vmatprep.subr.mxu0 0.0
        %1578 = vmatpush1.msra.mxu0 0.0
        %1579 = vmatprep.subr.mxu0 0.0
        %1580 = vmatpush1.msra.mxu0 0.0
        %1581 = vmatprep.subr.mxu0 0.0
        %1582 = vmatpush1.msra.mxu0 0.0
        %1583 = vmatprep.subr.mxu0 0.0
        %1584 = vmatpush1.msra.mxu0 0.0
        %1585 = vmatprep.subr.mxu0 0.0
        %1586 = vmatpush1.msra.mxu0 0.0
        %1587 = vmatprep.subr.mxu0 0.0
        %1588 = vmatpush1.msra.mxu0 0.0
        %1589 = vmatprep.subr.mxu0 0.0
        %1590 = vmatpush1.msra.mxu0 0.0
        %1591 = vmatprep.subr.mxu0 0.0
        %1592 = vmatpush1.msra.mxu0 0.0
        %1593 = vmatprep.subr.mxu0 0.0
        %1594 = vmatpush1.msra.mxu0 0.0
        %1595 = vmatprep.subr.mxu0 0.0
        %1596 = vmatpush1.msra.mxu0 0.0
        %1597 = vmatprep.subr.mxu0 0.0
        %1598 = vmatpush1.msra.mxu0 0.0
        %1599 = vmatprep.subr.mxu0 0.0
        %1600 = vmatpush1.msra.mxu0 0.0
        %1601 = vmatprep.subr.mxu0 0.0
        %1602 = vmatpush1.msra.mxu0 0.0
        %1603 = vmatprep.subr.mxu0 0.0
        %1604 = vmatpush1.msra.mxu0 0.0
        %1605 = vmatprep.subr.mxu0 0.0
        %1606 = vmatpush1.msra.mxu0 0.0
        %1607 = vmatprep.subr.mxu0 0.0
        %1608 = vmatpush1.msra.mxu0 0.0
        %1609 = vmatprep.subr.mxu0 0.0
        %1610 = vmatpush1.msra.mxu0 0.0
        %1611 = vmatprep.mubr.f32.mxu0 0.0
        %1612 = vmatmul.mubr.f32.gmra.mrb[0].mxu0 %v1452
        %v1613 = vpop.f32.mrb[0].mxu0
        %v1614 = vadd.f32 0.0, %v1613
        %v1615 = vpop.f32.mrb[0].mxu0
        %1616 = vmatprep.mubr.f32.mxu0 0.0
        %1617 = vmatmul.mubr.f32.gmra.mrb[0].mxu0 %v1455
        %v1618 = vpop.f32.mrb[0].mxu0
        %v1619 = vadd.f32 0.0, %v1618
        %v1620 = vpop.f32.mrb[0].mxu0
        %1621 = vmatprep.mubr.f32.mxu0 0.0
        %1622 = vmatmul.mubr.f32.gmra.mrb[0].mxu0 %v1458
        %v1623 = vpop.f32.mrb[0].mxu0
        %v1624 = vadd.f32 0.0, %v1623
        %v1625 = vpop.f32.mrb[0].mxu0
        %1626 = vmatprep.mubr.f32.mxu0 0.0
        %1627 = vmatmul.mubr.f32.gmra.mrb[0].mxu0 %v1461
        %v1628 = vpop.f32.mrb[0].mxu0
        %v1629 = vadd.f32 0.0, %v1628
        %v1630 = vpop.f32.mrb[0].mxu0
        %1631 = vmatprep.mubr.f32.mxu0 0.0
        %1632 = vmatmul.mubr.f32.gmra.mrb[0].mxu0 %v1464
        %v1633 = vpop.f32.mrb[0].mxu0
        %v1634 = vadd.f32 0.0, %v1633
        %v1635 = vpop.f32.mrb[0].mxu0
        %1636 = vmatprep.mubr.f32.mxu0 0.0
        %1637 = vmatmul.mubr.f32.gmra.mrb[0].mxu0 %v1467
        %v1638 = vpop.f32.mrb[0].mxu0
        %v1639 = vadd.f32 0.0, %v1638
        %v1640 = vpop.f32.mrb[0].mxu0
        %1641 = vmatprep.mubr.f32.mxu0 0.0
        %1642 = vmatmul.mubr.f32.gmra.mrb[0].mxu0 %v1470
        %v1643 = vpop.f32.mrb[0].mxu0
        %v1644 = vadd.f32 0.0, %v1643
        %v1645 = vpop.f32.mrb[0].mxu0
        %1646 = vmatprep.mubr.f32.mxu0 0.0
        %1647 = vmatmul.mubr.f32.gmra.mrb[0].mxu0 %v1473
        %v1648 = vpop.f32.mrb[0].mxu0
        %v1649 = vadd.f32 0.0, %v1648
        %v1650 = vpop.f32.mrb[0].mxu0
        %1651 = vmatprep.mubr.f32.mxu0 0.0
        %1652 = vmatmul.mubr.f32.gmra.mrb[0].mxu0 %v1476
        %v1653 = vpop.f32.mrb[0].mxu0
        %v1654 = vadd.f32 0.0, %v1653
        %v1655 = vpop.f32.mrb[0].mxu0
        %1656 = vmatprep.mubr.f32.mxu0 0.0
        %1657 = vmatmul.mubr.f32.gmra.mrb[0].mxu0 %v1479
        %v1658 = vpop.f32.mrb[0].mxu0
        %v1659 = vadd.f32 0.0, %v1658
        %v1660 = vpop.f32.mrb[0].mxu0
        %1661 = vmatprep.mubr.f32.mxu0 0.0
        %1662 = vmatmul.mubr.f32.gmra.mrb[0].mxu0 %v1482
        %v1663 = vpop.f32.mrb[0].mxu0
        %v1664 = vadd.f32 0.0, %v1663
        %v1665 = vpop.f32.mrb[0].mxu0
        %1666 = vmatprep.mubr.f32.mxu0 0.0
        %1667 = vmatmul.mubr.f32.gmra.mrb[0].mxu0 %v1485
        %v1668 = vpop.f32.mrb[0].mxu0
        %v1669 = vadd.f32 0.0, %v1668
        %v1670 = vpop.f32.mrb[0].mxu0
        %1671 = vmatprep.mubr.f32.mxu0 0.0
        %1672 = vmatmul.mubr.f32.gmra.mrb[0].mxu0 %v1488
        %v1673 = vpop.f32.mrb[0].mxu0
        %v1674 = vadd.f32 0.0, %v1673
        %v1675 = vpop.f32.mrb[0].mxu0
        %1676 = vmatprep.mubr.f32.mxu0 0.0
        %1677 = vmatmul.mubr.f32.gmra.mrb[0].mxu0 %v1491
        %v1678 = vpop.f32.mrb[0].mxu0
        %v1679 = vadd.f32 0.0, %v1678
        %v1680 = vpop.f32.mrb[0].mxu0
        %1681 = vmatprep.mubr.f32.mxu0 0.0
        %1682 = vmatmul.mubr.f32.gmra.mrb[0].mxu0 %v1494
        %v1683 = vpop.f32.mrb[0].mxu0
        %v1684 = vadd.f32 0.0, %v1683
        %v1685 = vpop.f32.mrb[0].mxu0
        %1686 = vmatprep.mubr.f32.mxu0 0.0
        %1687 = vmatmul.mubr.f32.gmra.mrb[0].mxu0 %v1497
        %v1688 = vpop.f32.mrb[0].mxu0
        %v1689 = vadd.f32 0.0, %v1688
        %v1690 = vpop.f32.mrb[0].mxu0
        %1691 = vmatprep.mubr.f32.mxu0 0.0
        %1692 = vmatmul.mubr.f32.gmra.mrb[0].mxu0 %v1500
        %v1693 = vpop.f32.mrb[0].mxu0
        %v1694 = vadd.f32 0.0, %v1693
        %v1695 = vpop.f32.mrb[0].mxu0
        %1696 = vmatprep.mubr.f32.mxu0 0.0
        %1697 = vmatmul.mubr.f32.gmra.mrb[0].mxu0 %v1503
        %v1698 = vpop.f32.mrb[0].mxu0
        %v1699 = vadd.f32 0.0, %v1698
        %v1700 = vpop.f32.mrb[0].mxu0
        %1701 = vmatprep.mubr.f32.mxu0 0.0
        %1702 = vmatmul.mubr.f32.gmra.mrb[0].mxu0 %v1506
        %v1703 = vpop.f32.mrb[0].mxu0
        %v1704 = vadd.f32 0.0, %v1703
        %v1705 = vpop.f32.mrb[0].mxu0
        %1706 = vmatprep.mubr.f32.mxu0 0.0
        %1707 = vmatmul.mubr.f32.gmra.mrb[0].mxu0 %v1509
        %v1708 = vpop.f32.mrb[0].mxu0
        %v1709 = vadd.f32 0.0, %v1708
        %v1710 = vpop.f32.mrb[0].mxu0
        %1711 = vmatprep.mubr.f32.mxu0 0.0
        %1712 = vmatmul.mubr.f32.gmra.mrb[0].mxu0 %v1512
        %v1713 = vpop.f32.mrb[0].mxu0
        %v1714 = vadd.f32 0.0, %v1713
        %v1715 = vpop.f32.mrb[0].mxu0
        %1716 = vmatprep.mubr.f32.mxu0 0.0
        %1717 = vmatmul.mubr.f32.gmra.mrb[0].mxu0 %v1515
        %v1718 = vpop.f32.mrb[0].mxu0
        %v1719 = vadd.f32 0.0, %v1718
        %v1720 = vpop.f32.mrb[0].mxu0
        %1721 = vmatprep.mubr.f32.mxu0 0.0
        %1722 = vmatmul.mubr.f32.gmra.mrb[0].mxu0 %v1518
        %v1723 = vpop.f32.mrb[0].mxu0
        %v1724 = vadd.f32 0.0, %v1723
        %v1725 = vpop.f32.mrb[0].mxu0
        %1726 = vmatprep.mubr.f32.mxu0 0.0
        %1727 = vmatmul.mubr.f32.gmra.mrb[0].mxu0 %v1521
        %v1728 = vpop.f32.mrb[0].mxu0
        %v1729 = vadd.f32 0.0, %v1728
        %v1730 = vpop.f32.mrb[0].mxu0
        %1731 = vmatprep.mubr.f32.mxu0 0.0
        %1732 = vmatmul.mubr.f32.gmra.mrb[0].mxu0 %v1524
        %v1733 = vpop.f32.mrb[0].mxu0
        %v1734 = vadd.f32 0.0, %v1733
        %v1735 = vpop.f32.mrb[0].mxu0
        %1736 = vmatprep.mubr.f32.mxu0 0.0
        %1737 = vmatmul.mubr.f32.gmra.mrb[0].mxu0 %v1527
        %v1738 = vpop.f32.mrb[0].mxu0
        %v1739 = vadd.f32 0.0, %v1738
        %v1740 = vpop.f32.mrb[0].mxu0
        %1741 = vmatprep.mubr.f32.mxu0 0.0
        %1742 = vmatmul.mubr.f32.gmra.mrb[0].mxu0 %v1530
        %v1743 = vpop.f32.mrb[0].mxu0
        %v1744 = vadd.f32 0.0, %v1743
        %v1745 = vpop.f32.mrb[0].mxu0
        %1746 = vmatprep.mubr.f32.mxu0 0.0
        %1747 = vmatmul.mubr.f32.gmra.mrb[0].mxu0 %v1533
        %v1748 = vpop.f32.mrb[0].mxu0
        %v1749 = vadd.f32 0.0, %v1748
        %v1750 = vpop.f32.mrb[0].mxu0
        %1751 = vmatprep.mubr.f32.mxu0 0.0
        %1752 = vmatmul.mubr.f32.gmra.mrb[0].mxu0 %v1536
        %v1753 = vpop.f32.mrb[0].mxu0
        %v1754 = vadd.f32 0.0, %v1753
        %v1755 = vpop.f32.mrb[0].mxu0
        %1756 = vmatprep.mubr.f32.mxu0 0.0
        %1757 = vmatmul.mubr.f32.gmra.mrb[0].mxu0 %v1539
        %v1758 = vpop.f32.mrb[0].mxu0
        %v1759 = vadd.f32 0.0, %v1758
        %v1760 = vpop.f32.mrb[0].mxu0
        %1761 = vmatprep.mubr.f32.mxu0 0.0
        %1762 = vmatmul.mubr.f32.gmra.mrb[0].mxu0 %v1542
        %v1763 = vpop.f32.mrb[0].mxu0
        %v1764 = vadd.f32 0.0, %v1763
        %v1765 = vpop.f32.mrb[0].mxu0
        %1766 = vmatprep.mubr.f32.mxu0 0.0
        %1767 = vmatmul.mubr.f32.gmra.mrb[0].mxu0 %v1545
        %v1768 = vpop.f32.mrb[0].mxu0
        %v1769 = vadd.f32 0.0, %v1768
        %v1770 = vpop.f32.mrb[0].mxu0
        %1771 = vdwg.mxu0
        %v1772 = vmul.f32 %v1614, 0.0625
        %v1773 = vmul.f32 %v1619, 0.0625
        %v1774 = vmul.f32 %v1624, 0.0625
        %v1775 = vmul.f32 %v1629, 0.0625
        %v1776 = vmul.f32 %v1634, 0.0625
        %v1777 = vmul.f32 %v1639, 0.0625
        %v1778 = vmul.f32 %v1644, 0.0625
        %v1779 = vmul.f32 %v1649, 0.0625
        %v1780 = vmul.f32 %v1654, 0.0625
        %v1781 = vmul.f32 %v1659, 0.0625
        %v1782 = vmul.f32 %v1664, 0.0625
        %v1783 = vmul.f32 %v1669, 0.0625
        %v1784 = vmul.f32 %v1674, 0.0625
        %v1785 = vmul.f32 %v1679, 0.0625
        %v1786 = vmul.f32 %v1684, 0.0625
        %v1787 = vmul.f32 %v1689, 0.0625
        %v1788 = vmul.f32 %v1694, 0.0625
        %v1789 = vmul.f32 %v1699, 0.0625
        %v1790 = vmul.f32 %v1704, 0.0625
        %v1791 = vmul.f32 %v1709, 0.0625
        %v1792 = vmul.f32 %v1714, 0.0625
        %v1793 = vmul.f32 %v1719, 0.0625
        %v1794 = vmul.f32 %v1724, 0.0625
        %v1795 = vmul.f32 %v1729, 0.0625
        %v1796 = vmul.f32 %v1734, 0.0625
        %v1797 = vmul.f32 %v1739, 0.0625
        %v1798 = vmul.f32 %v1744, 0.0625
        %v1799 = vmul.f32 %v1749, 0.0625
        %v1800 = vmul.f32 %v1754, 0.0625
        %v1801 = vmul.f32 %v1759, 0.0625
        %v1802 = vmul.f32 %v1764, 0.0625
        %v1803 = vmul.f32 %v1769, 0.0625
        %v1804 = vadd.f32 %v1772, 1e-05
        %v1805 = vadd.f32 %v1773, 1e-05
        %v1806 = vadd.f32 %v1774, 1e-05
        %v1807 = vadd.f32 %v1775, 1e-05
        %v1808 = vadd.f32 %v1776, 1e-05
        %v1809 = vadd.f32 %v1777, 1e-05
        %v1810 = vadd.f32 %v1778, 1e-05
        %v1811 = vadd.f32 %v1779, 1e-05
        %v1812 = vadd.f32 %v1780, 1e-05
        %v1813 = vadd.f32 %v1781, 1e-05
        %v1814 = vadd.f32 %v1782, 1e-05
        %v1815 = vadd.f32 %v1783, 1e-05
        %v1816 = vadd.f32 %v1784, 1e-05
        %v1817 = vadd.f32 %v1785, 1e-05
        %v1818 = vadd.f32 %v1786, 1e-05
        %v1819 = vadd.f32 %v1787, 1e-05
        %v1820 = vadd.f32 %v1788, 1e-05
        %v1821 = vadd.f32 %v1789, 1e-05
        %v1822 = vadd.f32 %v1790, 1e-05
        %v1823 = vadd.f32 %v1791, 1e-05
        %v1824 = vadd.f32 %v1792, 1e-05
        %v1825 = vadd.f32 %v1793, 1e-05
        %v1826 = vadd.f32 %v1794, 1e-05
        %v1827 = vadd.f32 %v1795, 1e-05
        %v1828 = vadd.f32 %v1796, 1e-05
        %v1829 = vadd.f32 %v1797, 1e-05
        %v1830 = vadd.f32 %v1798, 1e-05
        %v1831 = vadd.f32 %v1799, 1e-05
        %v1832 = vadd.f32 %v1800, 1e-05
        %v1833 = vadd.f32 %v1801, 1e-05
        %v1834 = vadd.f32 %v1802, 1e-05
        %v1835 = vadd.f32 %v1803, 1e-05
        %v1836 = vrsqrt.pop %v1804
        %v1837 = vrsqrt.pop %v1805
        %v1838 = vrsqrt.pop %v1806
        %v1839 = vrsqrt.pop %v1807
        %v1840 = vrsqrt.pop %v1808
        %v1841 = vrsqrt.pop %v1809
        %v1842 = vrsqrt.pop %v1810
        %v1843 = vrsqrt.pop %v1811
        %v1844 = vrsqrt.pop %v1812
        %v1845 = vrsqrt.pop %v1813
        %v1846 = vrsqrt.pop %v1814
        %v1847 = vrsqrt.pop %v1815
        %v1848 = vrsqrt.pop %v1816
        %v1849 = vrsqrt.pop %v1817
        %v1850 = vrsqrt.pop %v1818
        %v1851 = vrsqrt.pop %v1819
        %v1852 = vrsqrt.pop %v1820
        %v1853 = vrsqrt.pop %v1821
        %v1854 = vrsqrt.pop %v1822
        %v1855 = vrsqrt.pop %v1823
        %v1856 = vrsqrt.pop %v1824
        %v1857 = vrsqrt.pop %v1825
        %v1858 = vrsqrt.pop %v1826
        %v1859 = vrsqrt.pop %v1827
        %v1860 = vrsqrt.pop %v1828
        %v1861 = vrsqrt.pop %v1829
        %v1862 = vrsqrt.pop %v1830
        %v1863 = vrsqrt.pop %v1831
        %v1864 = vrsqrt.pop %v1832
        %v1865 = vrsqrt.pop %v1833
        %v1866 = vrsqrt.pop %v1834
        %v1867 = vrsqrt.pop %v1835
        %1868 = vmatprep.subr.mxu0 0.0
        %1869 = vmatpush1.msra.mxu0 %v792
        %1870 = vmatprep.subr.mxu0 0.0
        %1871 = vmatpush1.msra.mxu0 %v793
        %1872 = vmatprep.subr.mxu0 0.0
        %1873 = vmatpush1.msra.mxu0 %v794
        %1874 = vmatprep.subr.mxu0 0.0
        %1875 = vmatpush1.msra.mxu0 %v795
        %1876 = vmatprep.subr.mxu0 0.0
        %1877 = vmatpush1.msra.mxu0 %v796
        %1878 = vmatprep.subr.mxu0 0.0
        %1879 = vmatpush1.msra.mxu0 %v797
        %1880 = vmatprep.subr.mxu0 0.0
        %1881 = vmatpush1.msra.mxu0 %v798
        %1882 = vmatprep.subr.mxu0 0.0
        %1883 = vmatpush1.msra.mxu0 %v799
        %1884 = vmatprep.subr.mxu0 0.0
        %1885 = vmatpush1.msra.mxu0 %v800
        %1886 = vmatprep.subr.mxu0 0.0
        %1887 = vmatpush1.msra.mxu0 %v801
        %1888 = vmatprep.subr.mxu0 0.0
        %1889 = vmatpush1.msra.mxu0 %v802
        %1890 = vmatprep.subr.mxu0 0.0
        %1891 = vmatpush1.msra.mxu0 %v803
        %1892 = vmatprep.subr.mxu0 0.0
        %1893 = vmatpush1.msra.mxu0 %v804
        %1894 = vmatprep.subr.mxu0 0.0
        %1895 = vmatpush1.msra.mxu0 %v805
        %1896 = vmatprep.subr.mxu0 0.0
        %1897 = vmatpush1.msra.mxu0 %v806
        %1898 = vmatprep.subr.mxu0 0.0
        %1899 = vmatpush1.msra.mxu0 %v807
        %1900 = vmatprep.subr.mxu0 0.0
        %1901 = vmatpush1.msra.mxu0 0.0
        %1902 = vmatprep.subr.mxu0 0.0
        %1903 = vmatpush1.msra.mxu0 0.0
        %1904 = vmatprep.subr.mxu0 0.0
        %1905 = vmatpush1.msra.mxu0 0.0
        %1906 = vmatprep.subr.mxu0 0.0
        %1907 = vmatpush1.msra.mxu0 0.0
        %1908 = vmatprep.subr.mxu0 0.0
        %1909 = vmatpush1.msra.mxu0 0.0
        %1910 = vmatprep.subr.mxu0 0.0
        %1911 = vmatpush1.msra.mxu0 0.0
        %1912 = vmatprep.subr.mxu0 0.0
        %1913 = vmatpush1.msra.mxu0 0.0
        %1914 = vmatprep.subr.mxu0 0.0
        %1915 = vmatpush1.msra.mxu0 0.0
        %1916 = vmatprep.subr.mxu0 0.0
        %1917 = vmatpush1.msra.mxu0 0.0
        %1918 = vmatprep.subr.mxu0 0.0
        %1919 = vmatpush1.msra.mxu0 0.0
        %1920 = vmatprep.subr.mxu0 0.0
        %1921 = vmatpush1.msra.mxu0 0.0
        %1922 = vmatprep.subr.mxu0 0.0
        %1923 = vmatpush1.msra.mxu0 0.0
        %1924 = vmatprep.subr.mxu0 0.0
        %1925 = vmatpush1.msra.mxu0 0.0
        %1926 = vmatprep.subr.mxu0 0.0
        %1927 = vmatpush1.msra.mxu0 0.0
        %1928 = vmatprep.subr.mxu0 0.0
        %1929 = vmatpush1.msra.mxu0 0.0
        %1930 = vmatprep.subr.mxu0 0.0
        %1931 = vmatpush1.msra.mxu0 0.0
        %1932 = vmatprep.mubr.f32.mxu0 0.0
        %1933 = vmatmul.mubr.f32.gmra.mrb[0].mxu0 %v1836
        %v1934 = vpop.f32.mrb[0].mxu0
        %v1935 = vadd.f32 0.0, %v1934
        %v1936 = vpop.f32.mrb[0].mxu0
        %1937 = vmatprep.mubr.f32.mxu0 0.0
        %1938 = vmatmul.mubr.f32.gmra.mrb[0].mxu0 %v1837
        %v1939 = vpop.f32.mrb[0].mxu0
        %v1940 = vadd.f32 0.0, %v1939
        %v1941 = vpop.f32.mrb[0].mxu0
        %1942 = vmatprep.mubr.f32.mxu0 0.0
        %1943 = vmatmul.mubr.f32.gmra.mrb[0].mxu0 %v1838
        %v1944 = vpop.f32.mrb[0].mxu0
        %v1945 = vadd.f32 0.0, %v1944
        %v1946 = vpop.f32.mrb[0].mxu0
        %1947 = vmatprep.mubr.f32.mxu0 0.0
        %1948 = vmatmul.mubr.f32.gmra.mrb[0].mxu0 %v1839
        %v1949 = vpop.f32.mrb[0].mxu0
        %v1950 = vadd.f32 0.0, %v1949
        %v1951 = vpop.f32.mrb[0].mxu0
        %1952 = vmatprep.mubr.f32.mxu0 0.0
        %1953 = vmatmul.mubr.f32.gmra.mrb[0].mxu0 %v1840
        %v1954 = vpop.f32.mrb[0].mxu0
        %v1955 = vadd.f32 0.0, %v1954
        %v1956 = vpop.f32.mrb[0].mxu0
        %1957 = vmatprep.mubr.f32.mxu0 0.0
        %1958 = vmatmul.mubr.f32.gmra.mrb[0].mxu0 %v1841
        %v1959 = vpop.f32.mrb[0].mxu0
        %v1960 = vadd.f32 0.0, %v1959
        %v1961 = vpop.f32.mrb[0].mxu0
        %1962 = vmatprep.mubr.f32.mxu0 0.0
        %1963 = vmatmul.mubr.f32.gmra.mrb[0].mxu0 %v1842
        %v1964 = vpop.f32.mrb[0].mxu0
        %v1965 = vadd.f32 0.0, %v1964
        %v1966 = vpop.f32.mrb[0].mxu0
        %1967 = vmatprep.mubr.f32.mxu0 0.0
        %1968 = vmatmul.mubr.f32.gmra.mrb[0].mxu0 %v1843
        %v1969 = vpop.f32.mrb[0].mxu0
        %v1970 = vadd.f32 0.0, %v1969
        %v1971 = vpop.f32.mrb[0].mxu0
        %1972 = vmatprep.mubr.f32.mxu0 0.0
        %1973 = vmatmul.mubr.f32.gmra.mrb[0].mxu0 %v1844
        %v1974 = vpop.f32.mrb[0].mxu0
        %v1975 = vadd.f32 0.0, %v1974
        %v1976 = vpop.f32.mrb[0].mxu0
        %1977 = vmatprep.mubr.f32.mxu0 0.0
        %1978 = vmatmul.mubr.f32.gmra.mrb[0].mxu0 %v1845
        %v1979 = vpop.f32.mrb[0].mxu0
        %v1980 = vadd.f32 0.0, %v1979
        %v1981 = vpop.f32.mrb[0].mxu0
        %1982 = vmatprep.mubr.f32.mxu0 0.0
        %1983 = vmatmul.mubr.f32.gmra.mrb[0].mxu0 %v1846
        %v1984 = vpop.f32.mrb[0].mxu0
        %v1985 = vadd.f32 0.0, %v1984
        %v1986 = vpop.f32.mrb[0].mxu0
        %1987 = vmatprep.mubr.f32.mxu0 0.0
        %1988 = vmatmul.mubr.f32.gmra.mrb[0].mxu0 %v1847
        %v1989 = vpop.f32.mrb[0].mxu0
        %v1990 = vadd.f32 0.0, %v1989
        %v1991 = vpop.f32.mrb[0].mxu0
        %1992 = vmatprep.mubr.f32.mxu0 0.0
        %1993 = vmatmul.mubr.f32.gmra.mrb[0].mxu0 %v1848
        %v1994 = vpop.f32.mrb[0].mxu0
        %v1995 = vadd.f32 0.0, %v1994
        %v1996 = vpop.f32.mrb[0].mxu0
        %1997 = vmatprep.mubr.f32.mxu0 0.0
        %1998 = vmatmul.mubr.f32.gmra.mrb[0].mxu0 %v1849
        %v1999 = vpop.f32.mrb[0].mxu0
        %v2000 = vadd.f32 0.0, %v1999
        %v2001 = vpop.f32.mrb[0].mxu0
        %2002 = vmatprep.mubr.f32.mxu0 0.0
        %2003 = vmatmul.mubr.f32.gmra.mrb[0].mxu0 %v1850
        %v2004 = vpop.f32.mrb[0].mxu0
        %v2005 = vadd.f32 0.0, %v2004
        %v2006 = vpop.f32.mrb[0].mxu0
        %2007 = vmatprep.mubr.f32.mxu0 0.0
        %2008 = vmatmul.mubr.f32.gmra.mrb[0].mxu0 %v1851
        %v2009 = vpop.f32.mrb[0].mxu0
        %v2010 = vadd.f32 0.0, %v2009
        %v2011 = vpop.f32.mrb[0].mxu0
        %2012 = vmatprep.mubr.f32.mxu0 0.0
        %2013 = vmatmul.mubr.f32.gmra.mrb[0].mxu0 %v1852
        %v2014 = vpop.f32.mrb[0].mxu0
        %v2015 = vadd.f32 0.0, %v2014
        %v2016 = vpop.f32.mrb[0].mxu0
        %2017 = vmatprep.mubr.f32.mxu0 0.0
        %2018 = vmatmul.mubr.f32.gmra.mrb[0].mxu0 %v1853
        %v2019 = vpop.f32.mrb[0].mxu0
        %v2020 = vadd.f32 0.0, %v2019
        %v2021 = vpop.f32.mrb[0].mxu0
        %2022 = vmatprep.mubr.f32.mxu0 0.0
        %2023 = vmatmul.mubr.f32.gmra.mrb[0].mxu0 %v1854
        %v2024 = vpop.f32.mrb[0].mxu0
        %v2025 = vadd.f32 0.0, %v2024
        %v2026 = vpop.f32.mrb[0].mxu0
        %2027 = vmatprep.mubr.f32.mxu0 0.0
        %2028 = vmatmul.mubr.f32.gmra.mrb[0].mxu0 %v1855
        %v2029 = vpop.f32.mrb[0].mxu0
        %v2030 = vadd.f32 0.0, %v2029
        %v2031 = vpop.f32.mrb[0].mxu0
        %2032 = vmatprep.mubr.f32.mxu0 0.0
        %2033 = vmatmul.mubr.f32.gmra.mrb[0].mxu0 %v1856
        %v2034 = vpop.f32.mrb[0].mxu0
        %v2035 = vadd.f32 0.0, %v2034
        %v2036 = vpop.f32.mrb[0].mxu0
        %2037 = vmatprep.mubr.f32.mxu0 0.0
        %2038 = vmatmul.mubr.f32.gmra.mrb[0].mxu0 %v1857
        %v2039 = vpop.f32.mrb[0].mxu0
        %v2040 = vadd.f32 0.0, %v2039
        %v2041 = vpop.f32.mrb[0].mxu0
        %2042 = vmatprep.mubr.f32.mxu0 0.0
        %2043 = vmatmul.mubr.f32.gmra.mrb[0].mxu0 %v1858
        %v2044 = vpop.f32.mrb[0].mxu0
        %v2045 = vadd.f32 0.0, %v2044
        %v2046 = vpop.f32.mrb[0].mxu0
        %2047 = vmatprep.mubr.f32.mxu0 0.0
        %2048 = vmatmul.mubr.f32.gmra.mrb[0].mxu0 %v1859
        %v2049 = vpop.f32.mrb[0].mxu0
        %v2050 = vadd.f32 0.0, %v2049
        %v2051 = vpop.f32.mrb[0].mxu0
        %2052 = vmatprep.mubr.f32.mxu0 0.0
        %2053 = vmatmul.mubr.f32.gmra.mrb[0].mxu0 %v1860
        %v2054 = vpop.f32.mrb[0].mxu0
        %v2055 = vadd.f32 0.0, %v2054
        %v2056 = vpop.f32.mrb[0].mxu0
        %2057 = vmatprep.mubr.f32.mxu0 0.0
        %2058 = vmatmul.mubr.f32.gmra.mrb[0].mxu0 %v1861
        %v2059 = vpop.f32.mrb[0].mxu0
        %v2060 = vadd.f32 0.0, %v2059
        %v2061 = vpop.f32.mrb[0].mxu0
        %2062 = vmatprep.mubr.f32.mxu0 0.0
        %2063 = vmatmul.mubr.f32.gmra.mrb[0].mxu0 %v1862
        %v2064 = vpop.f32.mrb[0].mxu0
        %v2065 = vadd.f32 0.0, %v2064
        %v2066 = vpop.f32.mrb[0].mxu0
        %2067 = vmatprep.mubr.f32.mxu0 0.0
        %2068 = vmatmul.mubr.f32.gmra.mrb[0].mxu0 %v1863
        %v2069 = vpop.f32.mrb[0].mxu0
        %v2070 = vadd.f32 0.0, %v2069
        %v2071 = vpop.f32.mrb[0].mxu0
        %2072 = vmatprep.mubr.f32.mxu0 0.0
        %2073 = vmatmul.mubr.f32.gmra.mrb[0].mxu0 %v1864
        %v2074 = vpop.f32.mrb[0].mxu0
        %v2075 = vadd.f32 0.0, %v2074
        %v2076 = vpop.f32.mrb[0].mxu0
        %2077 = vmatprep.mubr.f32.mxu0 0.0
        %2078 = vmatmul.mubr.f32.gmra.mrb[0].mxu0 %v1865
        %v2079 = vpop.f32.mrb[0].mxu0
        %v2080 = vadd.f32 0.0, %v2079
        %v2081 = vpop.f32.mrb[0].mxu0
        %2082 = vmatprep.mubr.f32.mxu0 0.0
        %2083 = vmatmul.mubr.f32.gmra.mrb[0].mxu0 %v1866
        %v2084 = vpop.f32.mrb[0].mxu0
        %v2085 = vadd.f32 0.0, %v2084
        %v2086 = vpop.f32.mrb[0].mxu0
        %2087 = vmatprep.mubr.f32.mxu0 0.0
        %2088 = vmatmul.mubr.f32.gmra.mrb[0].mxu0 %v1867
        %v2089 = vpop.f32.mrb[0].mxu0
        %v2090 = vadd.f32 0.0, %v2089
        %v2091 = vpop.f32.mrb[0].mxu0
        %2092 = vdwg.mxu0
        %v2093 = vld [vmem:[%s2] sm:$0x1]
        %v2094 = vld [vmem:[%s3] sm:$0x1]
        %v2095 = vmul.f32 %v1387, %v1935
        %v2096 = vmul.f32 %v1388, %v1940
        %v2097 = vmul.f32 %v1389, %v1945
        %v2098 = vmul.f32 %v1390, %v1950
        %v2099 = vmul.f32 %v1391, %v1955
        %v2100 = vmul.f32 %v1392, %v1960
        %v2101 = vmul.f32 %v1393, %v1965
        %v2102 = vmul.f32 %v1394, %v1970
        %v2103 = vmul.f32 %v1395, %v1975
        %v2104 = vmul.f32 %v1396, %v1980
        %v2105 = vmul.f32 %v1397, %v1985
        %v2106 = vmul.f32 %v1398, %v1990
        %v2107 = vmul.f32 %v1399, %v1995
        %v2108 = vmul.f32 %v1400, %v2000
        %v2109 = vmul.f32 %v1401, %v2005
        %v2110 = vmul.f32 %v1402, %v2010
        %v2111 = vmul.f32 %v1403, %v2015
        %v2112 = vmul.f32 %v1404, %v2020
        %v2113 = vmul.f32 %v1405, %v2025
        %v2114 = vmul.f32 %v1406, %v2030
        %v2115 = vmul.f32 %v1407, %v2035
        %v2116 = vmul.f32 %v1408, %v2040
        %v2117 = vmul.f32 %v1409, %v2045
        %v2118 = vmul.f32 %v1410, %v2050
        %v2119 = vmul.f32 %v1411, %v2055
        %v2120 = vmul.f32 %v1412, %v2060
        %v2121 = vmul.f32 %v1413, %v2065
        %v2122 = vmul.f32 %v1414, %v2070
        %v2123 = vmul.f32 %v1415, %v2075
        %v2124 = vmul.f32 %v1416, %v2080
        %v2125 = vmul.f32 %v1417, %v2085
        %v2126 = vmul.f32 %v1418, %v2090
        %v2128 = vlaneseq
        %v2129 = vshrl.u32 %v2128, 7
        %v2130 = vsub.s32 0, %v2129
        %v2131 = vrot.slane %v2093, %v2130
        %v2133 = vmul.f32 %v2095, %v2131
        %v2134 = vmul.f32 %v2096, %v2131
        %v2135 = vmul.f32 %v2097, %v2131
        %v2136 = vmul.f32 %v2098, %v2131
        %v2137 = vmul.f32 %v2099, %v2131
        %v2138 = vmul.f32 %v2100, %v2131
        %v2139 = vmul.f32 %v2101, %v2131
        %v2140 = vmul.f32 %v2102, %v2131
        %v2141 = vmul.f32 %v2103, %v2131
        %v2142 = vmul.f32 %v2104, %v2131
        %v2143 = vmul.f32 %v2105, %v2131
        %v2144 = vmul.f32 %v2106, %v2131
        %v2145 = vmul.f32 %v2107, %v2131
        %v2146 = vmul.f32 %v2108, %v2131
        %v2147 = vmul.f32 %v2109, %v2131
        %v2148 = vmul.f32 %v2110, %v2131
        %v2149 = vmul.f32 %v2111, %v2131
        %v2150 = vmul.f32 %v2112, %v2131
        %v2151 = vmul.f32 %v2113, %v2131
        %v2152 = vmul.f32 %v2114, %v2131
        %v2153 = vmul.f32 %v2115, %v2131
        %v2154 = vmul.f32 %v2116, %v2131
        %v2155 = vmul.f32 %v2117, %v2131
        %v2156 = vmul.f32 %v2118, %v2131
        %v2157 = vmul.f32 %v2119, %v2131
        %v2158 = vmul.f32 %v2120, %v2131
        %v2159 = vmul.f32 %v2121, %v2131
        %v2160 = vmul.f32 %v2122, %v2131
        %v2161 = vmul.f32 %v2123, %v2131
        %v2162 = vmul.f32 %v2124, %v2131
        %v2163 = vmul.f32 %v2125, %v2131
        %v2164 = vmul.f32 %v2126, %v2131
        %v2166 = vlaneseq
        %v2167 = vshrl.u32 %v2166, 7
        %v2168 = vsub.s32 0, %v2167
        %v2169 = vrot.slane %v2094, %v2168
        %v2171 = vadd.f32 %v2133, %v2169
        %v2172 = vadd.f32 %v2134, %v2169
        %v2173 = vadd.f32 %v2135, %v2169
        %v2174 = vadd.f32 %v2136, %v2169
        %v2175 = vadd.f32 %v2137, %v2169
        %v2176 = vadd.f32 %v2138, %v2169
        %v2177 = vadd.f32 %v2139, %v2169
        %v2178 = vadd.f32 %v2140, %v2169
        %v2179 = vadd.f32 %v2141, %v2169
        %v2180 = vadd.f32 %v2142, %v2169
        %v2181 = vadd.f32 %v2143, %v2169
        %v2182 = vadd.f32 %v2144, %v2169
        %v2183 = vadd.f32 %v2145, %v2169
        %v2184 = vadd.f32 %v2146, %v2169
        %v2185 = vadd.f32 %v2147, %v2169
        %v2186 = vadd.f32 %v2148, %v2169
        %v2187 = vadd.f32 %v2149, %v2169
        %v2188 = vadd.f32 %v2150, %v2169
        %v2189 = vadd.f32 %v2151, %v2169
        %v2190 = vadd.f32 %v2152, %v2169
        %v2191 = vadd.f32 %v2153, %v2169
        %v2192 = vadd.f32 %v2154, %v2169
        %v2193 = vadd.f32 %v2155, %v2169
        %v2194 = vadd.f32 %v2156, %v2169
        %v2195 = vadd.f32 %v2157, %v2169
        %v2196 = vadd.f32 %v2158, %v2169
        %v2197 = vadd.f32 %v2159, %v2169
        %v2198 = vadd.f32 %v2160, %v2169
        %v2199 = vadd.f32 %v2161, %v2169
        %v2200 = vadd.f32 %v2162, %v2169
        %v2201 = vadd.f32 %v2163, %v2169
        %v2202 = vadd.f32 %v2164, %v2169
        %2203 = vst.msk [vmem:[%s259] sm:$0xff] %vm808, %v2171
        %2204 = vst.msk [vmem:[%s259 + $0x8] sm:$0xff] %vm808, %v2172
        %2205 = vst.msk [vmem:[%s259 + $0x10] sm:$0xff] %vm808, %v2173
        %2206 = vst.msk [vmem:[%s259 + $0x18] sm:$0xff] %vm808, %v2174
        %2207 = vst.msk [vmem:[%s259 + $0x20] sm:$0xff] %vm808, %v2175
        %2208 = vst.msk [vmem:[%s259 + $0x28] sm:$0xff] %vm808, %v2176
        %2209 = vst.msk [vmem:[%s259 + $0x30] sm:$0xff] %vm808, %v2177
        %2210 = vst.msk [vmem:[%s259 + $0x38] sm:$0xff] %vm808, %v2178
        %2211 = vst.msk [vmem:[%s259 + $0x40] sm:$0xff] %vm808, %v2179
        %2212 = vst.msk [vmem:[%s259 + $0x48] sm:$0xff] %vm808, %v2180
        %2213 = vst.msk [vmem:[%s259 + $0x50] sm:$0xff] %vm808, %v2181
        %2214 = vst.msk [vmem:[%s259 + $0x58] sm:$0xff] %vm808, %v2182
        %2215 = vst.msk [vmem:[%s259 + $0x60] sm:$0xff] %vm808, %v2183
        %2216 = vst.msk [vmem:[%s259 + $0x68] sm:$0xff] %vm808, %v2184
        %2217 = vst.msk [vmem:[%s259 + $0x70] sm:$0xff] %vm808, %v2185
        %2218 = vst.msk [vmem:[%s259 + $0x78] sm:$0xff] %vm808, %v2186
        %2219 = vst.msk [vmem:[%s259 + $0x80] sm:$0xff] %vm808, %v2187
        %2220 = vst.msk [vmem:[%s259 + $0x88] sm:$0xff] %vm808, %v2188
        %2221 = vst.msk [vmem:[%s259 + $0x90] sm:$0xff] %vm808, %v2189
        %2222 = vst.msk [vmem:[%s259 + $0x98] sm:$0xff] %vm808, %v2190
        %2223 = vst.msk [vmem:[%s259 + $0xa0] sm:$0xff] %vm808, %v2191
        %2224 = vst.msk [vmem:[%s259 + $0xa8] sm:$0xff] %vm808, %v2192
        %2225 = vst.msk [vmem:[%s259 + $0xb0] sm:$0xff] %vm808, %v2193
        %2226 = vst.msk [vmem:[%s259 + $0xb8] sm:$0xff] %vm808, %v2194
        %2227 = vst.msk [vmem:[%s259 + $0xc0] sm:$0xff] %vm808, %v2195
        %2228 = vst.msk [vmem:[%s259 + $0xc8] sm:$0xff] %vm808, %v2196
        %2229 = vst.msk [vmem:[%s259 + $0xd0] sm:$0xff] %vm808, %v2197
        %2230 = vst.msk [vmem:[%s259 + $0xd8] sm:$0xff] %vm808, %v2198
        %2231 = vst.msk [vmem:[%s259 + $0xe0] sm:$0xff] %vm808, %v2199
        %2232 = vst.msk [vmem:[%s259 + $0xe8] sm:$0xff] %vm808, %v2200
        %2233 = vst.msk [vmem:[%s259 + $0xf0] sm:$0xff] %vm808, %v2201
        %2234 = vst.msk [vmem:[%s259 + $0xf8] sm:$0xff] %vm808, %v2202
        %s2235 = smul.u32 32, %s24
        %p2236 = scmp.lt.s32.totalorder %s23, 1
        %s2237 = scalar_select %p2236, %s23, 1
        %p2238 = scmp.lt.s32.totalorder %s2235, 127
        %s2239 = scalar_select %p2238, %s2235, 127
        %s2240 = smul.addr %s2237, 128
        %s2241 = sadd.s32 %s2239, %s2240
        %s2242 = smul.addr %s2241, 8
        %s2243 = scalar_lea.vmem %s4, %s2242
        // Predicated region
        $region45: #{tpu_custom_call.1} parent=35 // pred_check
          %p2244 = pneg %p142
        $region46: #{tpu_custom_call.1} parent=35 // pred_check_branch
          %2246 = sbr.rel (%p2244) target = $region48
        $region47: #{tpu_custom_call.1} parent=35 // pred_region
          %s2247 = smul.u32 32, %s24
        $region48: #{tpu_custom_call.1} parent=35 // pred_fallthru
          _
      $region36: #{tpu_custom_call.1} parent=5 // pred_fallthru
        _
      %p2248 = scmp.le.s32.totalorder 2, %s14
      // Predicated region
      $region49: #{tpu_custom_call.1} parent=5 // pred_check
        %p2249 = pneg %p2248
      $region50: #{tpu_custom_call.1} parent=5 // pred_check_branch
        %2251 = sbr.rel (%p2249) target = $region52
      $region51: #{tpu_custom_call.1} parent=5 // pred_region
        %s2252 = ssub.s32 %s14, 2
        // Predicated region
        $region53: #{tpu_custom_call.1} parent=51 // pred_check
          %p2253 = pneg %p148
        $region54: #{tpu_custom_call.1} parent=51 // pred_check_branch
          %2255 = sbr.rel (%p2253) target = $region56
        $region55: #{tpu_custom_call.1} parent=51 // pred_region
          %s2256 = smul.u32 32, %s26
          %p2257 = scmp.lt.s32.totalorder %s25, 1
          %s2258 = scalar_select %p2257, %s25, 1
          %p2259 = scmp.lt.s32.totalorder %s2256, 127
          %s2260 = scalar_select %p2259, %s2256, 127
          %s2261 = smul.addr %s2258, 128
          %s2262 = sadd.s32 %s2260, %s2261
          %s2263 = smul.addr %s2262, 8
          %s2264 = scalar_lea.vmem %s4, %s2263
        $region56: #{tpu_custom_call.1} parent=51 // pred_fallthru
          _
      $region52: #{tpu_custom_call.1} parent=5 // pred_fallthru
        _
    $region6: #{tpu_custom_call.1} parent=1 // loop_footer
      %s18 = sadd.s32 1, %s14
    $region7: #{tpu_custom_call.1} parent=1 // loop_footer_branch
      %13 = sbr.rel target = $region3
    $region8: #{tpu_custom_call.1} parent=1 // loop_exit
      _
    %2265 = vsyncpa [#allocation3], 1
    %s2266 = scalar_lea.sflag [#allocation3], 1
    %2267 = vsyncpa %s2266, 1
    %2268 = vsyncpa [#allocation5], 1

</llo_original>
